<compile_context>
chip_gen: v7x
topology: tpu7x:2x2x1
jax: 0.10.0
libtpu: 0.0.40
codegen_flags: <defaults>
</compile_context>

<pallas_src>
import functools
import math

import jax
import jax.numpy as jnp
from jax import lax
from jax.experimental import pallas as pl
from jax.experimental.pallas import tpu as pltpu


# -----------------------------------------------------------------------------
# Fused forward kernel (one grid step = one batch element).
# -----------------------------------------------------------------------------
def _fused_forward_kernel(
    patches_ref,                     # (ROWS, 128)  conv1 im2col rows (one batch)
    w1_ref, sc1_ref, sh1_ref,        # (128, 64), (1, 64), (1, 64)
    sel1_ref,                        # (3, P1, L1)  pool1 selection matrices
    w2_ref, sc2_ref, sh2_ref,        # (3, 64, 128), (1, 128), (1, 128)
    sel2_ref,                        # (3, P2, L2)  pool2 selection matrices
    wgtp_ref, bgtp_ref,              # (128, 3*inter), (1, 3*inter)
    wz_ref, scz_ref, shz_ref,        # (inter, 128), (1, 128), (1, 128)
    w3_ref, sc3_ref, sh3_ref,        # (3, 128, 256), (1, 256), (1, 256)
    wl_ref, bl_ref,                  # (256, 61), (1, 61)
    o_ref,                           # (1, 1, 61)
    *, l1, l2, l3, inter):
    f32 = jnp.float32

    # ---- conv1 (im2col matmul) + folded BN + ELU(alpha=1) ----
    h1 = jnp.dot(patches_ref[...], w1_ref[...], preferred_element_type=f32)
    h1 = h1 * sc1_ref[...] + sh1_ref[...]
    h1 = jnp.where(h1 > 0.0, h1, jnp.exp(jnp.minimum(h1, 0.0)) - 1.0)
    h1 = h1[:l1, :]                                            # (29, 64) valid rows

    # ---- MaxPool1d(3, stride=2): 3 selection matmuls + elementwise max ----
    p1 = jnp.maximum(
        jnp.maximum(jnp.dot(sel1_ref[0], h1, preferred_element_type=f32),
                    jnp.dot(sel1_ref[1], h1, preferred_element_type=f32)),
        jnp.dot(sel1_ref[2], h1, preferred_element_type=f32))  # (14, 64)

    # ---- conv2 (k=3, s=1) as 3 accumulated tap matmuls + folded BN + ReLU ----
    acc = jnp.dot(p1[0:l2, :], w2_ref[0], preferred_element_type=f32)
    acc = acc + jnp.dot(p1[1:1 + l2, :], w2_ref[1], preferred_element_type=f32)
    acc = acc + jnp.dot(p1[2:2 + l2, :], w2_ref[2], preferred_element_type=f32)
    h2 = jnp.maximum(acc * sc2_ref[...] + sh2_ref[...], 0.0)   # (12, 128)

    # ---- MaxPool1d(3, stride=2) ----
    p2 = jnp.maximum(
        jnp.maximum(jnp.dot(sel2_ref[0], h2, preferred_element_type=f32),
                    jnp.dot(sel2_ref[1], h2, preferred_element_type=f32)),
        jnp.dot(sel2_ref[2], h2, preferred_element_type=f32))  # (5, 128)

    # ---- NLBlockND(128, 32), embedded Gaussian: packed g|theta|phi ----
    gtp = jnp.dot(p2, wgtp_ref[...], preferred_element_type=f32) + bgtp_ref[...]
    g = gtp[:, 0:inter]
    th = gtp[:, inter:2 * inter]
    ph = gtp[:, 2 * inter:3 * inter]
    f = lax.dot_general(th, ph, (((1,), (1,)), ((), ())),
                        preferred_element_type=f32)            # (5, 5)
    f = f - jnp.max(f, axis=-1, keepdims=True)
    e = jnp.exp(f)
    attn = e / jnp.sum(e, axis=-1, keepdims=True)              # softmax
    y = jnp.dot(attn, g, preferred_element_type=f32)           # (5, inter)
    z = jnp.dot(y, wz_ref[...], preferred_element_type=f32)
    z = z * scz_ref[...] + shz_ref[...]                        # W_z bias + BN folded
    nlo = z + p2                                               # residual, (5, 128)

    # ---- conv3 (k=3, s=1) + folded BN + ReLU ----
    acc = jnp.dot(nlo[0:l3, :], w3_ref[0], preferred_element_type=f32)
    acc = acc + jnp.dot(nlo[1:1 + l3, :], w3_ref[1], preferred_element_type=f32)
    acc = acc + jnp.dot(nlo[2:2 + l3, :], w3_ref[2], preferred_element_type=f32)
    h3 = jnp.maximum(acc * sc3_ref[...] + sh3_ref[...], 0.0)   # (3, 256)

    # ---- AdaptiveAvgPool1d(1) + Flatten + Linear(256, 61) ----
    pooled = jnp.mean(h3, axis=0, keepdims=True)               # (1, 256)
    logits = jnp.dot(pooled, wl_ref[...], preferred_element_type=f32) + bl_ref[...]
    o_ref[...] = logits.reshape(o_ref.shape)


# -----------------------------------------------------------------------------
# Wrapper: weight packing / BN folding / conv1 im2col + single pallas_call.
# -----------------------------------------------------------------------------
def _fold_bn(conv_bias, gamma, beta, running_mean, running_var, eps):
    # eval-mode BatchNorm1d folded onto the preceding matmul (scale, shift).
    scale = gamma / jnp.sqrt(running_var + eps)
    shift = (conv_bias - running_mean) * scale + beta
    return scale.reshape(1, -1), shift.reshape(1, -1)


def _pool_sel(lin, lout, k=3, stride=2):
    # Selection matrices S[i][j, stride*j + i] = 1 for MaxPool via matmul taps.
    rows = stride * jnp.arange(lout)
    return jnp.stack([jax.nn.one_hot(rows + i, lin, dtype=jnp.float32)
                      for i in range(k)], axis=0)              # (k, lout, lin)


def basic_conv_forward(x, params, eps=1e-5):
    n, cin, l = x.shape
    k1, s1 = params["w1"].shape[2], 2
    co1 = params["w1"].shape[0]            # 64
    co2 = params["w2"].shape[0]            # 128
    co3 = params["w3"].shape[0]            # 256
    inter = params["nl"]["wg"].shape[0]    # 32
    ncls = params["wl"].shape[0]           # 61

    l1 = (l - k1) // s1 + 1                # 29
    lp1 = (l1 - 3) // 2 + 1                # 14
    l2 = lp1 - 3 + 1                       # 12
    lp2 = (l2 - 3) // 2 + 1                # 5
    l3 = lp2 - 3 + 1                       # 3

    # conv1 im2col (the only stride-2 conv); channel-major / tap-minor columns,
    # rows padded per batch to a multiple of 8 sublanes, cols 126 -> 128 lanes.
    rows = pl.cdiv(l1, 8) * 8              # 32
    ck = cin * k1                          # 126
    ckp = pl.cdiv(ck, 128) * 128           # 128
    taps = [x[:, :, i: i + s1 * (l1 - 1) + 1: s1] for i in range(k1)]
    patches = jnp.stack(taps, axis=-1)                          # (N, Cin, L1, K)
    patches = patches.transpose(0, 2, 1, 3).reshape(n, l1, ck)  # (N, L1, Cin*K)
    patches = jnp.pad(patches, ((0, 0), (0, rows - l1), (0, ckp - ck)))
    patches = patches.reshape(n * rows, ckp)                    # (N*32, 128)

    # Weights in channel-last matmul form, eval-mode BN folded
    # (running_mean=0, running_var=1 — synthetic inference assumption).
    zeros = lambda c: jnp.zeros((c,), jnp.float32)
    ones = lambda c: jnp.ones((c,), jnp.float32)
    w1m = jnp.pad(params["w1"].reshape(co1, ck).T, ((0, ckp - ck), (0, 0)))
    sc1, sh1 = _fold_bn(params["b1"], params["g1"], params["be1"],
                        zeros(co1), ones(co1), eps)
    w2t = params["w2"].transpose(2, 1, 0)                       # (3, 64, 128)
    sc2, sh2 = _fold_bn(params["b2"], params["g2"], params["be2"],
                        zeros(co2), ones(co2), eps)
    w3t = params["w3"].transpose(2, 1, 0)                       # (3, 128, 256)
    sc3, sh3 = _fold_bn(params["b3"], params["g3"], params["be3"],
                        zeros(co3), ones(co3), eps)

    nl = params["nl"]
    wgtp = jnp.concatenate([nl["wg"].T, nl["wt"].T, nl["wp"].T], axis=1)  # (128, 96)
    bgtp = jnp.concatenate([nl["bg"], nl["bt"], nl["bp"]]).reshape(1, 3 * inter)
    wzm = nl["wz"].T                                             # (32, 128)
    scz, shz = _fold_bn(nl["bz"], nl["gamma_z"], nl["beta_z"],
                        zeros(co2), ones(co2), eps)

    wlm = params["wl"].T                                         # (256, 61)
    blm = params["bl"].reshape(1, ncls)

    sel1 = _pool_sel(l1, lp1)                                    # (3, 14, 29)
    sel2 = _pool_sel(l2, lp2)                                    # (3, 5, 12)

    operands = (patches, w1m, sc1, sh1, sel1,
                w2t, sc2, sh2, sel2,
                wgtp, bgtp, wzm, scz, shz,
                w3t, sc3, sh3, wlm, blm)

    def const_spec(a):
        nd = a.ndim

        def idx(i):
            return (0,) * nd
        return pl.BlockSpec(tuple(a.shape), idx)

    in_specs = ([pl.BlockSpec((rows, ckp), lambda i: (i, 0))]
                + [const_spec(a) for a in operands[1:]])
    out_specs = pl.BlockSpec((1, 1, ncls), lambda i: (i, 0, 0))

    # Advisory cost estimate (matmul flops dominate; exact values not critical).
    mm = lambda m, k, nn: 2 * m * k * nn
    per_batch = (mm(rows, ckp, co1) + 3 * mm(lp1, l1, co1) + 3 * mm(l2, co1, co2)
                 + 3 * mm(lp2, l2, co2) + mm(lp2, co2, 3 * inter)
                 + mm(lp2, inter, lp2) + mm(lp2, lp2, inter) + mm(lp2, inter, co2)
                 + 3 * mm(l3, co2, co3) + mm(1, co3, ncls))
    cost = pl.CostEstimate(
        flops=n * per_batch,
        transcendentals=n * (rows * co1 + lp2 * lp2),
        bytes_accessed=sum(int(a.size) * a.dtype.itemsize for a in operands)
        + n * ncls * 4)

    out = pl.pallas_call(
        functools.partial(_fused_forward_kernel, l1=l1, l2=l2, l3=l3, inter=inter),
        grid=(n,),
        out_shape=jax.ShapeDtypeStruct((n, 1, ncls), jnp.float32),
        in_specs=in_specs,
        out_specs=out_specs,
        compiler_params=pltpu.CompilerParams(
            dimension_semantics=("parallel",),     # v7x: one batch element per TC
            vmem_limit_bytes=16 * 1024 * 1024),
        cost_estimate=cost,
    )(*operands)
    return out.reshape(n, ncls)


# -----------------------------------------------------------------------------
# Deterministic synthetic parameter initialization (shapes from __init__).
# -----------------------------------------------------------------------------
def init_params(key):
    ks = jax.random.split(key, 24)
    it = iter(range(24))

    def conv(co, ci, k):
        w = jax.random.normal(ks[next(it)], (co, ci, k), jnp.float32) / math.sqrt(ci * k)
        b = 0.01 * jax.random.normal(ks[next(it)], (co,), jnp.float32)
        return w, b

    def bn(c):
        g = 1.0 + 0.05 * jax.random.normal(ks[next(it)], (c,), jnp.float32)
        b = 0.05 * jax.random.normal(ks[next(it)], (c,), jnp.float32)
        return g, b

    p = {}
    p["w1"], p["b1"] = conv(64, 18, 7)
    p["g1"], p["be1"] = bn(64)
    p["w2"], p["b2"] = conv(128, 64, 3)
    p["g2"], p["be2"] = bn(128)

    nl = {}
    wg3, nl["bg"] = conv(32, 128, 1)
    wt3, nl["bt"] = conv(32, 128, 1)
    wp3, nl["bp"] = conv(32, 128, 1)
    wz3, nl["bz"] = conv(128, 32, 1)
    nl["wg"], nl["wt"], nl["wp"], nl["wz"] = (wg3[..., 0], wt3[..., 0],
                                              wp3[..., 0], wz3[..., 0])
    # NOTE: reference NLBlockND zero-inits the W_z BN weight; generic init here.
    nl["gamma_z"], nl["beta_z"] = bn(128)
    p["nl"] = nl

    p["w3"], p["b3"] = conv(256, 128, 3)
    p["g3"], p["be3"] = bn(256)
    p["wl"] = jax.random.normal(ks[next(it)], (61, 256), jnp.float32) / math.sqrt(256)
    p["bl"] = 0.01 * jax.random.normal(ks[next(it)], (61,), jnp.float32)
    return p


if __name__ == "__main__":
    key = jax.random.PRNGKey(0)
    pkey, xkey = jax.random.split(key)
    params = init_params(pkey)
    # PyTorch-convention NCL input: batch=2, channels=18, length=64
    x = jax.random.normal(xkey, (2, 18, 64), jnp.float32)
    fwd = jax.jit(basic_conv_forward)
    out = fwd(x, params)
    jax.block_until_ready(out)
    assert out.shape == (2, 61), out.shape
    assert bool(jnp.all(jnp.isfinite(out)))
    print("KERNEL_OK")
</pallas_src>

<mosaic_0001>
module attributes {stable_mosaic.version = 11 : i64} {
  func.func @_fused_forward_kernel(%arg0: i32, %arg1: memref<32x128xf32, #tpu.memory_space<vmem>>, %arg2: memref<128x64xf32, #tpu.memory_space<vmem>>, %arg3: memref<1x64xf32, #tpu.memory_space<vmem>>, %arg4: memref<1x64xf32, #tpu.memory_space<vmem>>, %arg5: memref<3x14x29xf32, #tpu.memory_space<vmem>>, %arg6: memref<3x64x128xf32, #tpu.memory_space<vmem>>, %arg7: memref<1x128xf32, #tpu.memory_space<vmem>>, %arg8: memref<1x128xf32, #tpu.memory_space<vmem>>, %arg9: memref<3x5x12xf32, #tpu.memory_space<vmem>>, %arg10: memref<128x96xf32, #tpu.memory_space<vmem>>, %arg11: memref<1x96xf32, #tpu.memory_space<vmem>>, %arg12: memref<32x128xf32, #tpu.memory_space<vmem>>, %arg13: memref<1x128xf32, #tpu.memory_space<vmem>>, %arg14: memref<1x128xf32, #tpu.memory_space<vmem>>, %arg15: memref<3x128x256xf32, #tpu.memory_space<vmem>>, %arg16: memref<1x256xf32, #tpu.memory_space<vmem>>, %arg17: memref<1x256xf32, #tpu.memory_space<vmem>>, %arg18: memref<256x61xf32, #tpu.memory_space<vmem>>, %arg19: memref<1x61xf32, #tpu.memory_space<vmem>>, %arg20: memref<1x1x61xf32, #tpu.memory_space<vmem>>) attributes {dimension_semantics = [#tpu.dimension_semantics<parallel>], iteration_bounds = array<i64: 2>, scalar_prefetch = 0 : i64, scratch_operands = 0 : i64, tpu.core_type = #tpu.core_type<tc>, window_params = [{transform_indices = @transform_0, window_bounds = array<i64: 32, 128>}, {pipeline_mode = #tpu.pipeline_mode<synchronous>, transform_indices = @transform_1, window_bounds = array<i64: 128, 64>}, {pipeline_mode = #tpu.pipeline_mode<synchronous>, transform_indices = @transform_2, window_bounds = array<i64: 1, 64>}, {pipeline_mode = #tpu.pipeline_mode<synchronous>, transform_indices = @transform_3, window_bounds = array<i64: 1, 64>}, {pipeline_mode = #tpu.pipeline_mode<synchronous>, transform_indices = @transform_4, window_bounds = array<i64: 3, 14, 29>}, {pipeline_mode = #tpu.pipeline_mode<synchronous>, transform_indices = @transform_5, window_bounds = array<i64: 3, 64, 128>}, {pipeline_mode = #tpu.pipeline_mode<synchronous>, transform_indices = @transform_6, window_bounds = array<i64: 1, 128>}, {pipeline_mode = #tpu.pipeline_mode<synchronous>, transform_indices = @transform_7, window_bounds = array<i64: 1, 128>}, {pipeline_mode = #tpu.pipeline_mode<synchronous>, transform_indices = @transform_8, window_bounds = array<i64: 3, 5, 12>}, {pipeline_mode = #tpu.pipeline_mode<synchronous>, transform_indices = @transform_9, window_bounds = array<i64: 128, 96>}, {pipeline_mode = #tpu.pipeline_mode<synchronous>, transform_indices = @transform_10, window_bounds = array<i64: 1, 96>}, {pipeline_mode = #tpu.pipeline_mode<synchronous>, transform_indices = @transform_11, window_bounds = array<i64: 32, 128>}, {pipeline_mode = #tpu.pipeline_mode<synchronous>, transform_indices = @transform_12, window_bounds = array<i64: 1, 128>}, {pipeline_mode = #tpu.pipeline_mode<synchronous>, transform_indices = @transform_13, window_bounds = array<i64: 1, 128>}, {pipeline_mode = #tpu.pipeline_mode<synchronous>, transform_indices = @transform_14, window_bounds = array<i64: 3, 128, 256>}, {pipeline_mode = #tpu.pipeline_mode<synchronous>, transform_indices = @transform_15, window_bounds = array<i64: 1, 256>}, {pipeline_mode = #tpu.pipeline_mode<synchronous>, transform_indices = @transform_16, window_bounds = array<i64: 1, 256>}, {pipeline_mode = #tpu.pipeline_mode<synchronous>, transform_indices = @transform_17, window_bounds = array<i64: 256, 61>}, {pipeline_mode = #tpu.pipeline_mode<synchronous>, transform_indices = @transform_18, window_bounds = array<i64: 1, 61>}, {transform_indices = @transform_19, window_bounds = array<i64: 1, 1, 61>}]} {
    %c0 = arith.constant 0 : index
    %c0_0 = arith.constant 0 : index
    %0 = vector.load %arg1[%c0, %c0_0] : memref<32x128xf32, #tpu.memory_space<vmem>>, vector<32x128xf32>
    %c0_1 = arith.constant 0 : index
    %c0_2 = arith.constant 0 : index
    %1 = vector.load %arg2[%c0_1, %c0_2] : memref<128x64xf32, #tpu.memory_space<vmem>>, vector<128x64xf32>
    %cst = arith.constant dense<0.000000e+00> : vector<32x64xf32>
    %2 = tpu.matmul %0, %1, %cst {dimension_numbers = #tpu.dot_dimension_numbers<[1], [0], [0], [1], [0, 0, 1, 1], [], []>} : vector<32x128xf32>, vector<128x64xf32>, vector<32x64xf32> -> vector<32x64xf32>
    %c0_3 = arith.constant 0 : index
    %c0_4 = arith.constant 0 : index
    %3 = vector.load %arg3[%c0_3, %c0_4] : memref<1x64xf32, #tpu.memory_space<vmem>>, vector<1x64xf32>
    %4 = vector.broadcast %3 : vector<1x64xf32> to vector<32x64xf32>
    %5 = arith.mulf %2, %4 : vector<32x64xf32>
    %c0_5 = arith.constant 0 : index
    %c0_6 = arith.constant 0 : index
    %6 = vector.load %arg4[%c0_5, %c0_6] : memref<1x64xf32, #tpu.memory_space<vmem>>, vector<1x64xf32>
    %7 = vector.broadcast %6 : vector<1x64xf32> to vector<32x64xf32>
    %8 = arith.addf %5, %7 : vector<32x64xf32>
    %cst_7 = arith.constant 0.000000e+00 : f32
    %9 = vector.broadcast %cst_7 : f32 to vector<32x64xf32>
    %10 = arith.cmpf ogt, %8, %9 : vector<32x64xf32>
    %cst_8 = arith.constant 0.000000e+00 : f32
    %11 = vector.broadcast %cst_8 : f32 to vector<32x64xf32>
    %12 = arith.minimumf %8, %11 : vector<32x64xf32>
    %13 = math.exp %12 : vector<32x64xf32>
    %cst_9 = arith.constant 1.000000e+00 : f32
    %14 = vector.broadcast %cst_9 : f32 to vector<32x64xf32>
    %15 = arith.subf %13, %14 : vector<32x64xf32>
    %16 = arith.select %10, %8, %15 : vector<32x64xi1>, vector<32x64xf32>
    %17 = vector.extract_strided_slice %16 {offsets = [0, 0], sizes = [29, 64], strides = [1, 1]} : vector<32x64xf32> to vector<29x64xf32>
    %c0_10 = arith.constant 0 : index
    %c0_11 = arith.constant 0 : index
    %c0_12 = arith.constant 0 : index
    %18 = vector.load %arg5[%c0_10, %c0_11, %c0_12] : memref<3x14x29xf32, #tpu.memory_space<vmem>>, vector<1x14x29xf32>
    %19 = vector.shape_cast %18 : vector<1x14x29xf32> to vector<14x29xf32>
    %cst_13 = arith.constant dense<0.000000e+00> : vector<14x64xf32>
    %20 = tpu.matmul %19, %17, %cst_13 {dimension_numbers = #tpu.dot_dimension_numbers<[1], [0], [0], [1], [0, 0, 1, 1], [], []>} : vector<14x29xf32>, vector<29x64xf32>, vector<14x64xf32> -> vector<14x64xf32>
    %c1 = arith.constant 1 : index
    %c0_14 = arith.constant 0 : index
    %c0_15 = arith.constant 0 : index
    %21 = vector.load %arg5[%c1, %c0_14, %c0_15] : memref<3x14x29xf32, #tpu.memory_space<vmem>>, vector<1x14x29xf32>
    %22 = vector.shape_cast %21 : vector<1x14x29xf32> to vector<14x29xf32>
    %cst_16 = arith.constant dense<0.000000e+00> : vector<14x64xf32>
    %23 = tpu.matmul %22, %17, %cst_16 {dimension_numbers = #tpu.dot_dimension_numbers<[1], [0], [0], [1], [0, 0, 1, 1], [], []>} : vector<14x29xf32>, vector<29x64xf32>, vector<14x64xf32> -> vector<14x64xf32>
    %24 = arith.maximumf %20, %23 : vector<14x64xf32>
    %c2 = arith.constant 2 : index
    %c0_17 = arith.constant 0 : index
    %c0_18 = arith.constant 0 : index
    %25 = vector.load %arg5[%c2, %c0_17, %c0_18] : memref<3x14x29xf32, #tpu.memory_space<vmem>>, vector<1x14x29xf32>
    %26 = vector.shape_cast %25 : vector<1x14x29xf32> to vector<14x29xf32>
    %cst_19 = arith.constant dense<0.000000e+00> : vector<14x64xf32>
    %27 = tpu.matmul %26, %17, %cst_19 {dimension_numbers = #tpu.dot_dimension_numbers<[1], [0], [0], [1], [0, 0, 1, 1], [], []>} : vector<14x29xf32>, vector<29x64xf32>, vector<14x64xf32> -> vector<14x64xf32>
    %28 = arith.maximumf %24, %27 : vector<14x64xf32>
    %29 = vector.extract_strided_slice %28 {offsets = [0, 0], sizes = [12, 64], strides = [1, 1]} : vector<14x64xf32> to vector<12x64xf32>
    %c0_20 = arith.constant 0 : index
    %c0_21 = arith.constant 0 : index
    %c0_22 = arith.constant 0 : index
    %30 = vector.load %arg6[%c0_20, %c0_21, %c0_22] : memref<3x64x128xf32, #tpu.memory_space<vmem>>, vector<1x64x128xf32>
    %31 = vector.shape_cast %30 : vector<1x64x128xf32> to vector<64x128xf32>
    %cst_23 = arith.constant dense<0.000000e+00> : vector<12x128xf32>
    %32 = tpu.matmul %29, %31, %cst_23 {dimension_numbers = #tpu.dot_dimension_numbers<[1], [0], [0], [1], [0, 0, 1, 1], [], []>} : vector<12x64xf32>, vector<64x128xf32>, vector<12x128xf32> -> vector<12x128xf32>
    %33 = vector.extract_strided_slice %28 {offsets = [1, 0], sizes = [12, 64], strides = [1, 1]} : vector<14x64xf32> to vector<12x64xf32>
    %c1_24 = arith.constant 1 : index
    %c0_25 = arith.constant 0 : index
    %c0_26 = arith.constant 0 : index
    %34 = vector.load %arg6[%c1_24, %c0_25, %c0_26] : memref<3x64x128xf32, #tpu.memory_space<vmem>>, vector<1x64x128xf32>
    %35 = vector.shape_cast %34 : vector<1x64x128xf32> to vector<64x128xf32>
    %cst_27 = arith.constant dense<0.000000e+00> : vector<12x128xf32>
    %36 = tpu.matmul %33, %35, %cst_27 {dimension_numbers = #tpu.dot_dimension_numbers<[1], [0], [0], [1], [0, 0, 1, 1], [], []>} : vector<12x64xf32>, vector<64x128xf32>, vector<12x128xf32> -> vector<12x128xf32>
    %37 = arith.addf %32, %36 : vector<12x128xf32>
    %38 = vector.extract_strided_slice %28 {offsets = [2, 0], sizes = [12, 64], strides = [1, 1]} : vector<14x64xf32> to vector<12x64xf32>
    %c2_28 = arith.constant 2 : index
    %c0_29 = arith.constant 0 : index
    %c0_30 = arith.constant 0 : index
    %39 = vector.load %arg6[%c2_28, %c0_29, %c0_30] : memref<3x64x128xf32, #tpu.memory_space<vmem>>, vector<1x64x128xf32>
    %40 = vector.shape_cast %39 : vector<1x64x128xf32> to vector<64x128xf32>
    %cst_31 = arith.constant dense<0.000000e+00> : vector<12x128xf32>
    %41 = tpu.matmul %38, %40, %cst_31 {dimension_numbers = #tpu.dot_dimension_numbers<[1], [0], [0], [1], [0, 0, 1, 1], [], []>} : vector<12x64xf32>, vector<64x128xf32>, vector<12x128xf32> -> vector<12x128xf32>
    %42 = arith.addf %37, %41 : vector<12x128xf32>
    %c0_32 = arith.constant 0 : index
    %c0_33 = arith.constant 0 : index
    %43 = vector.load %arg7[%c0_32, %c0_33] : memref<1x128xf32, #tpu.memory_space<vmem>>, vector<1x128xf32>
    %44 = vector.broadcast %43 : vector<1x128xf32> to vector<12x128xf32>
    %45 = arith.mulf %42, %44 : vector<12x128xf32>
    %c0_34 = arith.constant 0 : index
    %c0_35 = arith.constant 0 : index
    %46 = vector.load %arg8[%c0_34, %c0_35] : memref<1x128xf32, #tpu.memory_space<vmem>>, vector<1x128xf32>
    %47 = vector.broadcast %46 : vector<1x128xf32> to vector<12x128xf32>
    %48 = arith.addf %45, %47 : vector<12x128xf32>
    %cst_36 = arith.constant 0.000000e+00 : f32
    %49 = vector.broadcast %cst_36 : f32 to vector<12x128xf32>
    %50 = arith.maximumf %48, %49 : vector<12x128xf32>
    %c0_37 = arith.constant 0 : index
    %c0_38 = arith.constant 0 : index
    %c0_39 = arith.constant 0 : index
    %51 = vector.load %arg9[%c0_37, %c0_38, %c0_39] : memref<3x5x12xf32, #tpu.memory_space<vmem>>, vector<1x5x12xf32>
    %52 = vector.shape_cast %51 : vector<1x5x12xf32> to vector<5x12xf32>
    %cst_40 = arith.constant dense<0.000000e+00> : vector<5x128xf32>
    %53 = tpu.matmul %52, %50, %cst_40 {dimension_numbers = #tpu.dot_dimension_numbers<[1], [0], [0], [1], [0, 0, 1, 1], [], []>} : vector<5x12xf32>, vector<12x128xf32>, vector<5x128xf32> -> vector<5x128xf32>
    %c1_41 = arith.constant 1 : index
    %c0_42 = arith.constant 0 : index
    %c0_43 = arith.constant 0 : index
    %54 = vector.load %arg9[%c1_41, %c0_42, %c0_43] : memref<3x5x12xf32, #tpu.memory_space<vmem>>, vector<1x5x12xf32>
    %55 = vector.shape_cast %54 : vector<1x5x12xf32> to vector<5x12xf32>
    %cst_44 = arith.constant dense<0.000000e+00> : vector<5x128xf32>
    %56 = tpu.matmul %55, %50, %cst_44 {dimension_numbers = #tpu.dot_dimension_numbers<[1], [0], [0], [1], [0, 0, 1, 1], [], []>} : vector<5x12xf32>, vector<12x128xf32>, vector<5x128xf32> -> vector<5x128xf32>
    %57 = arith.maximumf %53, %56 : vector<5x128xf32>
    %c2_45 = arith.constant 2 : index
    %c0_46 = arith.constant 0 : index
    %c0_47 = arith.constant 0 : index
    %58 = vector.load %arg9[%c2_45, %c0_46, %c0_47] : memref<3x5x12xf32, #tpu.memory_space<vmem>>, vector<1x5x12xf32>
    %59 = vector.shape_cast %58 : vector<1x5x12xf32> to vector<5x12xf32>
    %cst_48 = arith.constant dense<0.000000e+00> : vector<5x128xf32>
    %60 = tpu.matmul %59, %50, %cst_48 {dimension_numbers = #tpu.dot_dimension_numbers<[1], [0], [0], [1], [0, 0, 1, 1], [], []>} : vector<5x12xf32>, vector<12x128xf32>, vector<5x128xf32> -> vector<5x128xf32>
    %61 = arith.maximumf %57, %60 : vector<5x128xf32>
    %c0_49 = arith.constant 0 : index
    %c0_50 = arith.constant 0 : index
    %62 = vector.load %arg10[%c0_49, %c0_50] : memref<128x96xf32, #tpu.memory_space<vmem>>, vector<128x96xf32>
    %cst_51 = arith.constant dense<0.000000e+00> : vector<5x96xf32>
    %63 = tpu.matmul %61, %62, %cst_51 {dimension_numbers = #tpu.dot_dimension_numbers<[1], [0], [0], [1], [0, 0, 1, 1], [], []>} : vector<5x128xf32>, vector<128x96xf32>, vector<5x96xf32> -> vector<5x96xf32>
    %c0_52 = arith.constant 0 : index
    %c0_53 = arith.constant 0 : index
    %64 = vector.load %arg11[%c0_52, %c0_53] : memref<1x96xf32, #tpu.memory_space<vmem>>, vector<1x96xf32>
    %65 = vector.broadcast %64 : vector<1x96xf32> to vector<5x96xf32>
    %66 = arith.addf %63, %65 : vector<5x96xf32>
    %67 = vector.extract_strided_slice %66 {offsets = [0, 0], sizes = [5, 32], strides = [1, 1]} : vector<5x96xf32> to vector<5x32xf32>
    %68 = vector.extract_strided_slice %66 {offsets = [0, 32], sizes = [5, 32], strides = [1, 1]} : vector<5x96xf32> to vector<5x32xf32>
    %69 = vector.extract_strided_slice %66 {offsets = [0, 64], sizes = [5, 32], strides = [1, 1]} : vector<5x96xf32> to vector<5x32xf32>
    %cst_54 = arith.constant dense<0.000000e+00> : vector<5x5xf32>
    %70 = tpu.matmul %68, %69, %cst_54 {dimension_numbers = #tpu.dot_dimension_numbers<[1], [1], [0], [0], [0, 0, 1, 0], [], []>} : vector<5x32xf32>, vector<5x32xf32>, vector<5x5xf32> -> vector<5x5xf32>
    %cst_55 = arith.constant dense<0xFF800000> : vector<5xf32>
    %71 = vector.multi_reduction <maximumf>, %70, %cst_55 [1] : vector<5x5xf32> to vector<5xf32>
    %72 = vector.shape_cast %71 : vector<5xf32> to vector<5x1xf32>
    %73 = vector.broadcast %72 : vector<5x1xf32> to vector<5x5xf32>
    %74 = arith.subf %70, %73 : vector<5x5xf32>
    %75 = math.exp %74 : vector<5x5xf32>
    %cst_56 = arith.constant dense<0.000000e+00> : vector<5xf32>
    %76 = vector.multi_reduction <add>, %75, %cst_56 [1] : vector<5x5xf32> to vector<5xf32>
    %77 = vector.shape_cast %76 : vector<5xf32> to vector<5x1xf32>
    %78 = vector.broadcast %77 : vector<5x1xf32> to vector<5x5xf32>
    %79 = arith.divf %75, %78 : vector<5x5xf32>
    %cst_57 = arith.constant dense<0.000000e+00> : vector<5x32xf32>
    %80 = tpu.matmul %79, %67, %cst_57 {dimension_numbers = #tpu.dot_dimension_numbers<[1], [0], [0], [1], [0, 0, 1, 1], [], []>} : vector<5x5xf32>, vector<5x32xf32>, vector<5x32xf32> -> vector<5x32xf32>
    %c0_58 = arith.constant 0 : index
    %c0_59 = arith.constant 0 : index
    %81 = vector.load %arg12[%c0_58, %c0_59] : memref<32x128xf32, #tpu.memory_space<vmem>>, vector<32x128xf32>
    %cst_60 = arith.constant dense<0.000000e+00> : vector<5x128xf32>
    %82 = tpu.matmul %80, %81, %cst_60 {dimension_numbers = #tpu.dot_dimension_numbers<[1], [0], [0], [1], [0, 0, 1, 1], [], []>} : vector<5x32xf32>, vector<32x128xf32>, vector<5x128xf32> -> vector<5x128xf32>
    %c0_61 = arith.constant 0 : index
    %c0_62 = arith.constant 0 : index
    %83 = vector.load %arg13[%c0_61, %c0_62] : memref<1x128xf32, #tpu.memory_space<vmem>>, vector<1x128xf32>
    %84 = vector.broadcast %83 : vector<1x128xf32> to vector<5x128xf32>
    %85 = arith.mulf %82, %84 : vector<5x128xf32>
    %c0_63 = arith.constant 0 : index
    %c0_64 = arith.constant 0 : index
    %86 = vector.load %arg14[%c0_63, %c0_64] : memref<1x128xf32, #tpu.memory_space<vmem>>, vector<1x128xf32>
    %87 = vector.broadcast %86 : vector<1x128xf32> to vector<5x128xf32>
    %88 = arith.addf %85, %87 : vector<5x128xf32>
    %89 = arith.addf %88, %61 : vector<5x128xf32>
    %90 = vector.extract_strided_slice %89 {offsets = [0, 0], sizes = [3, 128], strides = [1, 1]} : vector<5x128xf32> to vector<3x128xf32>
    %c0_65 = arith.constant 0 : index
    %c0_66 = arith.constant 0 : index
    %c0_67 = arith.constant 0 : index
    %91 = vector.load %arg15[%c0_65, %c0_66, %c0_67] : memref<3x128x256xf32, #tpu.memory_space<vmem>>, vector<1x128x256xf32>
    %92 = vector.shape_cast %91 : vector<1x128x256xf32> to vector<128x256xf32>
    %cst_68 = arith.constant dense<0.000000e+00> : vector<3x256xf32>
    %93 = tpu.matmul %90, %92, %cst_68 {dimension_numbers = #tpu.dot_dimension_numbers<[1], [0], [0], [1], [0, 0, 1, 1], [], []>} : vector<3x128xf32>, vector<128x256xf32>, vector<3x256xf32> -> vector<3x256xf32>
    %94 = vector.extract_strided_slice %89 {offsets = [1, 0], sizes = [3, 128], strides = [1, 1]} : vector<5x128xf32> to vector<3x128xf32>
    %c1_69 = arith.constant 1 : index
    %c0_70 = arith.constant 0 : index
    %c0_71 = arith.constant 0 : index
    %95 = vector.load %arg15[%c1_69, %c0_70, %c0_71] : memref<3x128x256xf32, #tpu.memory_space<vmem>>, vector<1x128x256xf32>
    %96 = vector.shape_cast %95 : vector<1x128x256xf32> to vector<128x256xf32>
    %cst_72 = arith.constant dense<0.000000e+00> : vector<3x256xf32>
    %97 = tpu.matmul %94, %96, %cst_72 {dimension_numbers = #tpu.dot_dimension_numbers<[1], [0], [0], [1], [0, 0, 1, 1], [], []>} : vector<3x128xf32>, vector<128x256xf32>, vector<3x256xf32> -> vector<3x256xf32>
    %98 = arith.addf %93, %97 : vector<3x256xf32>
    %99 = vector.extract_strided_slice %89 {offsets = [2, 0], sizes = [3, 128], strides = [1, 1]} : vector<5x128xf32> to vector<3x128xf32>
    %c2_73 = arith.constant 2 : index
    %c0_74 = arith.constant 0 : index
    %c0_75 = arith.constant 0 : index
    %100 = vector.load %arg15[%c2_73, %c0_74, %c0_75] : memref<3x128x256xf32, #tpu.memory_space<vmem>>, vector<1x128x256xf32>
    %101 = vector.shape_cast %100 : vector<1x128x256xf32> to vector<128x256xf32>
    %cst_76 = arith.constant dense<0.000000e+00> : vector<3x256xf32>
    %102 = tpu.matmul %99, %101, %cst_76 {dimension_numbers = #tpu.dot_dimension_numbers<[1], [0], [0], [1], [0, 0, 1, 1], [], []>} : vector<3x128xf32>, vector<128x256xf32>, vector<3x256xf32> -> vector<3x256xf32>
    %103 = arith.addf %98, %102 : vector<3x256xf32>
    %c0_77 = arith.constant 0 : index
    %c0_78 = arith.constant 0 : index
    %104 = vector.load %arg16[%c0_77, %c0_78] : memref<1x256xf32, #tpu.memory_space<vmem>>, vector<1x256xf32>
    %105 = vector.broadcast %104 : vector<1x256xf32> to vector<3x256xf32>
    %106 = arith.mulf %103, %105 : vector<3x256xf32>
    %c0_79 = arith.constant 0 : index
    %c0_80 = arith.constant 0 : index
    %107 = vector.load %arg17[%c0_79, %c0_80] : memref<1x256xf32, #tpu.memory_space<vmem>>, vector<1x256xf32>
    %108 = vector.broadcast %107 : vector<1x256xf32> to vector<3x256xf32>
    %109 = arith.addf %106, %108 : vector<3x256xf32>
    %cst_81 = arith.constant 0.000000e+00 : f32
    %110 = vector.broadcast %cst_81 : f32 to vector<3x256xf32>
    %111 = arith.maximumf %109, %110 : vector<3x256xf32>
    %cst_82 = arith.constant dense<0.000000e+00> : vector<256xf32>
    %112 = vector.multi_reduction <add>, %111, %cst_82 [0] : vector<3x256xf32> to vector<256xf32>
    %113 = vector.shape_cast %112 : vector<256xf32> to vector<1x256xf32>
    %cst_83 = arith.constant 3.000000e+00 : f32
    %114 = vector.broadcast %cst_83 : f32 to vector<1x256xf32>
    %115 = arith.divf %113, %114 : vector<1x256xf32>
    %c0_84 = arith.constant 0 : index
    %c0_85 = arith.constant 0 : index
    %116 = vector.load %arg18[%c0_84, %c0_85] : memref<256x61xf32, #tpu.memory_space<vmem>>, vector<256x61xf32>
    %cst_86 = arith.constant dense<0.000000e+00> : vector<1x61xf32>
    %117 = tpu.matmul %115, %116, %cst_86 {dimension_numbers = #tpu.dot_dimension_numbers<[1], [0], [0], [1], [0, 0, 1, 1], [], []>} : vector<1x256xf32>, vector<256x61xf32>, vector<1x61xf32> -> vector<1x61xf32>
    %c0_87 = arith.constant 0 : index
    %c0_88 = arith.constant 0 : index
    %118 = vector.load %arg19[%c0_87, %c0_88] : memref<1x61xf32, #tpu.memory_space<vmem>>, vector<1x61xf32>
    %119 = arith.addf %117, %118 : vector<1x61xf32>
    %120 = vector.shape_cast %119 : vector<1x61xf32> to vector<1x1x61xf32>
    %c0_89 = arith.constant 0 : index
    %c0_90 = arith.constant 0 : index
    %c0_91 = arith.constant 0 : index
    %121 = vector.load %arg20[%c0_89, %c0_90, %c0_91] : memref<1x1x61xf32, #tpu.memory_space<vmem>>, vector<1x1x61xf32>
    tpu.vector_store %arg20[%c0_89, %c0_90, %c0_91], %120 {strides = array<i32>} : memref<1x1x61xf32, #tpu.memory_space<vmem>>, vector<1x1x61xf32>,
    return
  }
  func.func @transform_0(%arg0: i32) -> (i32, i32) {
    %c0_i32 = arith.constant 0 : i32
    %c0_i32_0 = arith.constant 0 : i32
    return %arg0, %c0_i32 : i32, i32
  }
  func.func @transform_1(%arg0: i32) -> (i32, i32) {
    %c0_i32 = arith.constant 0 : i32
    %c0_i32_0 = arith.constant 0 : i32
    %c0_i32_1 = arith.constant 0 : i32
    return %c0_i32, %c0_i32_0 : i32, i32
  }
  func.func @transform_2(%arg0: i32) -> (i32, i32) {
    %c0_i32 = arith.constant 0 : i32
    %c0_i32_0 = arith.constant 0 : i32
    %c0_i32_1 = arith.constant 0 : i32
    return %c0_i32, %c0_i32_0 : i32, i32
  }
  func.func @transform_3(%arg0: i32) -> (i32, i32) {
    %c0_i32 = arith.constant 0 : i32
    %c0_i32_0 = arith.constant 0 : i32
    %c0_i32_1 = arith.constant 0 : i32
    return %c0_i32, %c0_i32_0 : i32, i32
  }
  func.func @transform_4(%arg0: i32) -> (i32, i32, i32) {
    %c0_i32 = arith.constant 0 : i32
    %c0_i32_0 = arith.constant 0 : i32
    %c0_i32_1 = arith.constant 0 : i32
    %c0_i32_2 = arith.constant 0 : i32
    return %c0_i32, %c0_i32_0, %c0_i32_1 : i32, i32, i32
  }
  func.func @transform_5(%arg0: i32) -> (i32, i32, i32) {
    %c0_i32 = arith.constant 0 : i32
    %c0_i32_0 = arith.constant 0 : i32
    %c0_i32_1 = arith.constant 0 : i32
    %c0_i32_2 = arith.constant 0 : i32
    return %c0_i32, %c0_i32_0, %c0_i32_1 : i32, i32, i32
  }
  func.func @transform_6(%arg0: i32) -> (i32, i32) {
    %c0_i32 = arith.constant 0 : i32
    %c0_i32_0 = arith.constant 0 : i32
    %c0_i32_1 = arith.constant 0 : i32
    return %c0_i32, %c0_i32_0 : i32, i32
  }
  func.func @transform_7(%arg0: i32) -> (i32, i32) {
    %c0_i32 = arith.constant 0 : i32
    %c0_i32_0 = arith.constant 0 : i32
    %c0_i32_1 = arith.constant 0 : i32
    return %c0_i32, %c0_i32_0 : i32, i32
  }
  func.func @transform_8(%arg0: i32) -> (i32, i32, i32) {
    %c0_i32 = arith.constant 0 : i32
    %c0_i32_0 = arith.constant 0 : i32
    %c0_i32_1 = arith.constant 0 : i32
    %c0_i32_2 = arith.constant 0 : i32
    return %c0_i32, %c0_i32_0, %c0_i32_1 : i32, i32, i32
  }
  func.func @transform_9(%arg0: i32) -> (i32, i32) {
    %c0_i32 = arith.constant 0 : i32
    %c0_i32_0 = arith.constant 0 : i32
    %c0_i32_1 = arith.constant 0 : i32
    return %c0_i32, %c0_i32_0 : i32, i32
  }
  func.func @transform_10(%arg0: i32) -> (i32, i32) {
    %c0_i32 = arith.constant 0 : i32
    %c0_i32_0 = arith.constant 0 : i32
    %c0_i32_1 = arith.constant 0 : i32
    return %c0_i32, %c0_i32_0 : i32, i32
  }
  func.func @transform_11(%arg0: i32) -> (i32, i32) {
    %c0_i32 = arith.constant 0 : i32
    %c0_i32_0 = arith.constant 0 : i32
    %c0_i32_1 = arith.constant 0 : i32
    return %c0_i32, %c0_i32_0 : i32, i32
  }
  func.func @transform_12(%arg0: i32) -> (i32, i32) {
    %c0_i32 = arith.constant 0 : i32
    %c0_i32_0 = arith.constant 0 : i32
    %c0_i32_1 = arith.constant 0 : i32
    return %c0_i32, %c0_i32_0 : i32, i32
  }
  func.func @transform_13(%arg0: i32) -> (i32, i32) {
    %c0_i32 = arith.constant 0 : i32
    %c0_i32_0 = arith.constant 0 : i32
    %c0_i32_1 = arith.constant 0 : i32
    return %c0_i32, %c0_i32_0 : i32, i32
  }
  func.func @transform_14(%arg0: i32) -> (i32, i32, i32) {
    %c0_i32 = arith.constant 0 : i32
    %c0_i32_0 = arith.constant 0 : i32
    %c0_i32_1 = arith.constant 0 : i32
    %c0_i32_2 = arith.constant 0 : i32
    return %c0_i32, %c0_i32_0, %c0_i32_1 : i32, i32, i32
  }
  func.func @transform_15(%arg0: i32) -> (i32, i32) {
    %c0_i32 = arith.constant 0 : i32
    %c0_i32_0 = arith.constant 0 : i32
    %c0_i32_1 = arith.constant 0 : i32
    return %c0_i32, %c0_i32_0 : i32, i32
  }
  func.func @transform_16(%arg0: i32) -> (i32, i32) {
    %c0_i32 = arith.constant 0 : i32
    %c0_i32_0 = arith.constant 0 : i32
    %c0_i32_1 = arith.constant 0 : i32
    return %c0_i32, %c0_i32_0 : i32, i32
  }
  func.func @transform_17(%arg0: i32) -> (i32, i32) {
    %c0_i32 = arith.constant 0 : i32
    %c0_i32_0 = arith.constant 0 : i32
    %c0_i32_1 = arith.constant 0 : i32
    return %c0_i32, %c0_i32_0 : i32, i32
  }
  func.func @transform_18(%arg0: i32) -> (i32, i32) {
    %c0_i32 = arith.constant 0 : i32
    %c0_i32_0 = arith.constant 0 : i32
    %c0_i32_1 = arith.constant 0 : i32
    return %c0_i32, %c0_i32_0 : i32, i32
  }
  func.func @transform_19(%arg0: i32) -> (i32, i32, i32) {
    %c0_i32 = arith.constant 0 : i32
    %c0_i32_0 = arith.constant 0 : i32
    %c0_i32_1 = arith.constant 0 : i32
    return %arg0, %c0_i32, %c0_i32_0 : i32, i32, i32
  }
}

</mosaic_0001>

<llo_original>
// kernel: basic_conv_forward.1
$region0: #{basic_conv_forward.1}
  #allocation0 [shape = 'u32[]', space=smem, size = 0x4, offset = 0x4, fixed_abs, tag = 'smem constant byte address 0x4 - core index']
  #allocation1 [shape = 'u32[144,128]{1,0:T(1,128)}', space=vmem, size = 0x12000, scoped, tag = 'internal scratch']
  %s0 = inlined_call_operand.vmem [shape: f32[64,128], index: 0, kind: input, shape index: {}]
  %s1 = inlined_call_operand.vmem [shape: f32[128,64], index: 1, kind: input, shape index: {}]
  %s2 = inlined_call_operand.vmem [shape: f32[1,64], index: 2, kind: input, shape index: {}]
  %s3 = inlined_call_operand.vmem [shape: f32[1,64], index: 3, kind: input, shape index: {}]
  %s4 = inlined_call_operand.vmem [shape: f32[3,14,29], index: 4, kind: input, shape index: {}]
  %s5 = inlined_call_operand.vmem [shape: f32[3,64,128], index: 5, kind: input, shape index: {}]
  %s6 = inlined_call_operand.vmem [shape: f32[1,128], index: 6, kind: input, shape index: {}]
  %s7 = inlined_call_operand.vmem [shape: f32[1,128], index: 7, kind: input, shape index: {}]
  %s8 = inlined_call_operand.vmem [shape: f32[3,5,12], index: 8, kind: input, shape index: {}]
  %s9 = inlined_call_operand.vmem [shape: f32[128,96], index: 9, kind: input, shape index: {}]
  %s10 = inlined_call_operand.vmem [shape: f32[1,96], index: 10, kind: input, shape index: {}]
  %s11 = inlined_call_operand.vmem [shape: f32[32,128], index: 11, kind: input, shape index: {}]
  %s12 = inlined_call_operand.vmem [shape: f32[1,128], index: 12, kind: input, shape index: {}]
  %s13 = inlined_call_operand.vmem [shape: f32[1,128], index: 13, kind: input, shape index: {}]
  %s14 = inlined_call_operand.vmem [shape: f32[3,128,256], index: 14, kind: input, shape index: {}]
  %s15 = inlined_call_operand.vmem [shape: f32[1,256], index: 15, kind: input, shape index: {}]
  %s16 = inlined_call_operand.vmem [shape: f32[1,256], index: 16, kind: input, shape index: {}]
  %s17 = inlined_call_operand.vmem [shape: f32[256,61], index: 17, kind: input, shape index: {}]
  %s18 = inlined_call_operand.vmem [shape: f32[1,61], index: 18, kind: input, shape index: {}]
  %s19 = inlined_call_operand.hbm [shape: f32[2,1,61], index: 19, kind: output, shape index: {}]
  %s20 = sld [smem:[#allocation0]]
  $region109: #{basic_conv_forward.1} parent=0
    _
  %s22 = ssub.s32 1, %s20
  %s23 = scalar_select 0, %s22, %s20
  $region1: #{basic_conv_forward.1} parent=0
    #allocation2 [shape = 'u8[1024]{0}', space=vmem, size = 0x400, scoped, tag = 'output window, operand 0']
    #allocation3 [shape = 's32[2]{0}', space=sflag, size = 0x8, scoped, tag = 'scoped memory for basic_conv_forward.1']
    %24 = vsyncpa [#allocation3], 0
    %s25 = scalar_lea.sflag [#allocation3], 1
    %26 = vsyncpa %s25, 0
    loop: start=0, step=1, limit=4
    $region2: #{basic_conv_forward.1} parent=1 // loop_pre_header
      _
    $region3: #{basic_conv_forward.1} parent=1 // loop_header
      %s28 = sphi 0, %s32
      %p29 = scmp.ge.s32.totalorder %s28, 4
      %s38 = sphi 0, %s40
      %s41 = sphi 0, %s38
      %s42 = sphi 0, %s41
      %s58 = sphi 0, %s42
      %s62 = sphi 0, %s62
      %s64 = sphi 0, %s62
      %s65 = sphi 0, %s64
      %s79 = sphi 0, %s65
      %s83 = sphi 0, %s83
      %s85 = sphi 0, %s83
      %s86 = sphi 0, %s85
      %s100 = sphi 0, %s86
      %s104 = sphi 0, %s104
      %s106 = sphi 0, %s104
      %s107 = sphi 0, %s106
      %s121 = sphi 0, %s107
      %s125 = sphi 0, %s125
      %s127 = sphi 0, %s125
      %s128 = sphi 0, %s127
      %s142 = sphi 0, %s128
      %s146 = sphi 0, %s146
      %s148 = sphi 0, %s146
      %s149 = sphi 0, %s148
      %s163 = sphi 0, %s149
      %s167 = sphi 0, %s167
      %s169 = sphi 0, %s167
      %s170 = sphi 0, %s169
      %s184 = sphi 0, %s170
      %s188 = sphi 0, %s188
      %s190 = sphi 0, %s188
      %s191 = sphi 0, %s190
      %s205 = sphi 0, %s191
      %s209 = sphi 0, %s209
      %s211 = sphi 0, %s209
      %s212 = sphi 0, %s211
      %s226 = sphi 0, %s212
      %s230 = sphi 0, %s230
      %s232 = sphi 0, %s230
      %s233 = sphi 0, %s232
      %s247 = sphi 0, %s233
      %s251 = sphi 0, %s251
      %s253 = sphi 0, %s251
      %s254 = sphi 0, %s253
      %s268 = sphi 0, %s254
      %s272 = sphi 0, %s272
      %s274 = sphi 0, %s272
      %s275 = sphi 0, %s274
      %s289 = sphi 0, %s275
      %s293 = sphi 0, %s293
      %s295 = sphi 0, %s293
      %s296 = sphi 0, %s295
      %s310 = sphi 0, %s296
      %s314 = sphi 0, %s314
      %s316 = sphi 0, %s314
      %s317 = sphi 0, %s316
      %s331 = sphi 0, %s317
      %s335 = sphi 0, %s335
      %s337 = sphi 0, %s335
      %s338 = sphi 0, %s337
      %s352 = sphi 0, %s338
      %s356 = sphi 0, %s356
      %s358 = sphi 0, %s356
      %s359 = sphi 0, %s358
      %s373 = sphi 0, %s359
      %s377 = sphi 0, %s377
      %s379 = sphi 0, %s377
      %s380 = sphi 0, %s379
      %s394 = sphi 0, %s380
      %s398 = sphi 0, %s398
      %s400 = sphi 0, %s398
      %s401 = sphi 0, %s400
      %s415 = sphi 0, %s401
      %s419 = sphi 0, %s419
      %s421 = sphi 0, %s419
      %s422 = sphi 0, %s421
      %s436 = sphi 0, %s422
      %s442 = sphi 0, %s444
      %s445 = sphi 0, %s442
      %s446 = sphi 0, %s445
      %s462 = sphi 0, %s446
    $region4: #{basic_conv_forward.1} parent=1 // loop_header_branch
      %31 = sbr.rel (%p29) target = $region8
    $region5: #{basic_conv_forward.1} parent=1 // loop_body
      %s33 = ssub.s32 %s28, 1
      %s34 = ssub.s32 %s28, 2
      %s35 = sadd.s32 %s28, 1
      %s36 = ssub.s32 %s28, %s35
      %p37 = scmp.eq.s32.totalorder %s36, 0
      %s39 = sadd.s32 %s38, 1
      %s40 = scalar_select %p37, %s38, %s39
      %p43 = pneg %p37
      %p44 = scmp.eq.s32.totalorder %s28, 1
      %p45 = por %p43, %p44
      %p46 = scmp.ne.s32.totalorder %s38, %s41
      %p47 = scmp.eq.s32.totalorder %s28, 0
      %p48 = por %p46, %p47
      %p49 = scmp.ne.s32.totalorder %s38, %s41
      %p50 = scmp.eq.s32.totalorder %s33, 1
      %p51 = por %p49, %p50
      %p52 = scmp.ne.s32.totalorder %s41, %s42
      %p53 = scmp.eq.s32.totalorder %s33, 0
      %p54 = por %p52, %p53
      %p55 = scmp.ne.s32.totalorder %s41, %s42
      %p56 = scmp.eq.s32.totalorder %s34, 1
      %p57 = por %p55, %p56
      %p59 = scmp.ne.s32.totalorder %s42, %s58
      %p60 = scmp.eq.s32.totalorder %s34, 0
      %p61 = por %p59, %p60
      %s63 = sadd.s32 %s62, 1
      %p66 = scmp.eq.s32.totalorder %s28, 1
      %p67 = scmp.ne.s32.totalorder %s62, %s64
      %p68 = scmp.eq.s32.totalorder %s28, 0
      %p69 = por %p67, %p68
      %p70 = scmp.ne.s32.totalorder %s62, %s64
      %p71 = scmp.eq.s32.totalorder %s33, 1
      %p72 = por %p70, %p71
      %p73 = scmp.ne.s32.totalorder %s64, %s65
      %p74 = scmp.eq.s32.totalorder %s33, 0
      %p75 = por %p73, %p74
      %p76 = scmp.ne.s32.totalorder %s64, %s65
      %p77 = scmp.eq.s32.totalorder %s34, 1
      %p78 = por %p76, %p77
      %p80 = scmp.ne.s32.totalorder %s65, %s79
      %p81 = scmp.eq.s32.totalorder %s34, 0
      %p82 = por %p80, %p81
      %s84 = sadd.s32 %s83, 1
      %p87 = scmp.eq.s32.totalorder %s28, 1
      %p88 = scmp.ne.s32.totalorder %s83, %s85
      %p89 = scmp.eq.s32.totalorder %s28, 0
      %p90 = por %p88, %p89
      %p91 = scmp.ne.s32.totalorder %s83, %s85
      %p92 = scmp.eq.s32.totalorder %s33, 1
      %p93 = por %p91, %p92
      %p94 = scmp.ne.s32.totalorder %s85, %s86
      %p95 = scmp.eq.s32.totalorder %s33, 0
      %p96 = por %p94, %p95
      %p97 = scmp.ne.s32.totalorder %s85, %s86
      %p98 = scmp.eq.s32.totalorder %s34, 1
      %p99 = por %p97, %p98
      %p101 = scmp.ne.s32.totalorder %s86, %s100
      %p102 = scmp.eq.s32.totalorder %s34, 0
      %p103 = por %p101, %p102
      %s105 = sadd.s32 %s104, 1
      %p108 = scmp.eq.s32.totalorder %s28, 1
      %p109 = scmp.ne.s32.totalorder %s104, %s106
      %p110 = scmp.eq.s32.totalorder %s28, 0
      %p111 = por %p109, %p110
      %p112 = scmp.ne.s32.totalorder %s104, %s106
      %p113 = scmp.eq.s32.totalorder %s33, 1
      %p114 = por %p112, %p113
      %p115 = scmp.ne.s32.totalorder %s106, %s107
      %p116 = scmp.eq.s32.totalorder %s33, 0
      %p117 = por %p115, %p116
      %p118 = scmp.ne.s32.totalorder %s106, %s107
      %p119 = scmp.eq.s32.totalorder %s34, 1
      %p120 = por %p118, %p119
      %p122 = scmp.ne.s32.totalorder %s107, %s121
      %p123 = scmp.eq.s32.totalorder %s34, 0
      %p124 = por %p122, %p123
      %s126 = sadd.s32 %s125, 1
      %p129 = scmp.eq.s32.totalorder %s28, 1
      %p130 = scmp.ne.s32.totalorder %s125, %s127
      %p131 = scmp.eq.s32.totalorder %s28, 0
      %p132 = por %p130, %p131
      %p133 = scmp.ne.s32.totalorder %s125, %s127
      %p134 = scmp.eq.s32.totalorder %s33, 1
      %p135 = por %p133, %p134
      %p136 = scmp.ne.s32.totalorder %s127, %s128
      %p137 = scmp.eq.s32.totalorder %s33, 0
      %p138 = por %p136, %p137
      %p139 = scmp.ne.s32.totalorder %s127, %s128
      %p140 = scmp.eq.s32.totalorder %s34, 1
      %p141 = por %p139, %p140
      %p143 = scmp.ne.s32.totalorder %s128, %s142
      %p144 = scmp.eq.s32.totalorder %s34, 0
      %p145 = por %p143, %p144
      %s147 = sadd.s32 %s146, 1
      %p150 = scmp.eq.s32.totalorder %s28, 1
      %p151 = scmp.ne.s32.totalorder %s146, %s148
      %p152 = scmp.eq.s32.totalorder %s28, 0
      %p153 = por %p151, %p152
      %p154 = scmp.ne.s32.totalorder %s146, %s148
      %p155 = scmp.eq.s32.totalorder %s33, 1
      %p156 = por %p154, %p155
      %p157 = scmp.ne.s32.totalorder %s148, %s149
      %p158 = scmp.eq.s32.totalorder %s33, 0
      %p159 = por %p157, %p158
      %p160 = scmp.ne.s32.totalorder %s148, %s149
      %p161 = scmp.eq.s32.totalorder %s34, 1
      %p162 = por %p160, %p161
      %p164 = scmp.ne.s32.totalorder %s149, %s163
      %p165 = scmp.eq.s32.totalorder %s34, 0
      %p166 = por %p164, %p165
      %s168 = sadd.s32 %s167, 1
      %p171 = scmp.eq.s32.totalorder %s28, 1
      %p172 = scmp.ne.s32.totalorder %s167, %s169
      %p173 = scmp.eq.s32.totalorder %s28, 0
      %p174 = por %p172, %p173
      %p175 = scmp.ne.s32.totalorder %s167, %s169
      %p176 = scmp.eq.s32.totalorder %s33, 1
      %p177 = por %p175, %p176
      %p178 = scmp.ne.s32.totalorder %s169, %s170
      %p179 = scmp.eq.s32.totalorder %s33, 0
      %p180 = por %p178, %p179
      %p181 = scmp.ne.s32.totalorder %s169, %s170
      %p182 = scmp.eq.s32.totalorder %s34, 1
      %p183 = por %p181, %p182
      %p185 = scmp.ne.s32.totalorder %s170, %s184
      %p186 = scmp.eq.s32.totalorder %s34, 0
      %p187 = por %p185, %p186
      %s189 = sadd.s32 %s188, 1
      %p192 = scmp.eq.s32.totalorder %s28, 1
      %p193 = scmp.ne.s32.totalorder %s188, %s190
      %p194 = scmp.eq.s32.totalorder %s28, 0
      %p195 = por %p193, %p194
      %p196 = scmp.ne.s32.totalorder %s188, %s190
      %p197 = scmp.eq.s32.totalorder %s33, 1
      %p198 = por %p196, %p197
      %p199 = scmp.ne.s32.totalorder %s190, %s191
      %p200 = scmp.eq.s32.totalorder %s33, 0
      %p201 = por %p199, %p200
      %p202 = scmp.ne.s32.totalorder %s190, %s191
      %p203 = scmp.eq.s32.totalorder %s34, 1
      %p204 = por %p202, %p203
      %p206 = scmp.ne.s32.totalorder %s191, %s205
      %p207 = scmp.eq.s32.totalorder %s34, 0
      %p208 = por %p206, %p207
      %s210 = sadd.s32 %s209, 1
      %p213 = scmp.eq.s32.totalorder %s28, 1
      %p214 = scmp.ne.s32.totalorder %s209, %s211
      %p215 = scmp.eq.s32.totalorder %s28, 0
      %p216 = por %p214, %p215
      %p217 = scmp.ne.s32.totalorder %s209, %s211
      %p218 = scmp.eq.s32.totalorder %s33, 1
      %p219 = por %p217, %p218
      %p220 = scmp.ne.s32.totalorder %s211, %s212
      %p221 = scmp.eq.s32.totalorder %s33, 0
      %p222 = por %p220, %p221
      %p223 = scmp.ne.s32.totalorder %s211, %s212
      %p224 = scmp.eq.s32.totalorder %s34, 1
      %p225 = por %p223, %p224
      %p227 = scmp.ne.s32.totalorder %s212, %s226
      %p228 = scmp.eq.s32.totalorder %s34, 0
      %p229 = por %p227, %p228
      %s231 = sadd.s32 %s230, 1
      %p234 = scmp.eq.s32.totalorder %s28, 1
      %p235 = scmp.ne.s32.totalorder %s230, %s232
      %p236 = scmp.eq.s32.totalorder %s28, 0
      %p237 = por %p235, %p236
      %p238 = scmp.ne.s32.totalorder %s230, %s232
      %p239 = scmp.eq.s32.totalorder %s33, 1
      %p240 = por %p238, %p239
      %p241 = scmp.ne.s32.totalorder %s232, %s233
      %p242 = scmp.eq.s32.totalorder %s33, 0
      %p243 = por %p241, %p242
      %p244 = scmp.ne.s32.totalorder %s232, %s233
      %p245 = scmp.eq.s32.totalorder %s34, 1
      %p246 = por %p244, %p245
      %p248 = scmp.ne.s32.totalorder %s233, %s247
      %p249 = scmp.eq.s32.totalorder %s34, 0
      %p250 = por %p248, %p249
      %s252 = sadd.s32 %s251, 1
      %p255 = scmp.eq.s32.totalorder %s28, 1
      %p256 = scmp.ne.s32.totalorder %s251, %s253
      %p257 = scmp.eq.s32.totalorder %s28, 0
      %p258 = por %p256, %p257
      %p259 = scmp.ne.s32.totalorder %s251, %s253
      %p260 = scmp.eq.s32.totalorder %s33, 1
      %p261 = por %p259, %p260
      %p262 = scmp.ne.s32.totalorder %s253, %s254
      %p263 = scmp.eq.s32.totalorder %s33, 0
      %p264 = por %p262, %p263
      %p265 = scmp.ne.s32.totalorder %s253, %s254
      %p266 = scmp.eq.s32.totalorder %s34, 1
      %p267 = por %p265, %p266
      %p269 = scmp.ne.s32.totalorder %s254, %s268
      %p270 = scmp.eq.s32.totalorder %s34, 0
      %p271 = por %p269, %p270
      %s273 = sadd.s32 %s272, 1
      %p276 = scmp.eq.s32.totalorder %s28, 1
      %p277 = scmp.ne.s32.totalorder %s272, %s274
      %p278 = scmp.eq.s32.totalorder %s28, 0
      %p279 = por %p277, %p278
      %p280 = scmp.ne.s32.totalorder %s272, %s274
      %p281 = scmp.eq.s32.totalorder %s33, 1
      %p282 = por %p280, %p281
      %p283 = scmp.ne.s32.totalorder %s274, %s275
      %p284 = scmp.eq.s32.totalorder %s33, 0
      %p285 = por %p283, %p284
      %p286 = scmp.ne.s32.totalorder %s274, %s275
      %p287 = scmp.eq.s32.totalorder %s34, 1
      %p288 = por %p286, %p287
      %p290 = scmp.ne.s32.totalorder %s275, %s289
      %p291 = scmp.eq.s32.totalorder %s34, 0
      %p292 = por %p290, %p291
      %s294 = sadd.s32 %s293, 1
      %p297 = scmp.eq.s32.totalorder %s28, 1
      %p298 = scmp.ne.s32.totalorder %s293, %s295
      %p299 = scmp.eq.s32.totalorder %s28, 0
      %p300 = por %p298, %p299
      %p301 = scmp.ne.s32.totalorder %s293, %s295
      %p302 = scmp.eq.s32.totalorder %s33, 1
      %p303 = por %p301, %p302
      %p304 = scmp.ne.s32.totalorder %s295, %s296
      %p305 = scmp.eq.s32.totalorder %s33, 0
      %p306 = por %p304, %p305
      %p307 = scmp.ne.s32.totalorder %s295, %s296
      %p308 = scmp.eq.s32.totalorder %s34, 1
      %p309 = por %p307, %p308
      %p311 = scmp.ne.s32.totalorder %s296, %s310
      %p312 = scmp.eq.s32.totalorder %s34, 0
      %p313 = por %p311, %p312
      %s315 = sadd.s32 %s314, 1
      %p318 = scmp.eq.s32.totalorder %s28, 1
      %p319 = scmp.ne.s32.totalorder %s314, %s316
      %p320 = scmp.eq.s32.totalorder %s28, 0
      %p321 = por %p319, %p320
      %p322 = scmp.ne.s32.totalorder %s314, %s316
      %p323 = scmp.eq.s32.totalorder %s33, 1
      %p324 = por %p322, %p323
      %p325 = scmp.ne.s32.totalorder %s316, %s317
      %p326 = scmp.eq.s32.totalorder %s33, 0
      %p327 = por %p325, %p326
      %p328 = scmp.ne.s32.totalorder %s316, %s317
      %p329 = scmp.eq.s32.totalorder %s34, 1
      %p330 = por %p328, %p329
      %p332 = scmp.ne.s32.totalorder %s317, %s331
      %p333 = scmp.eq.s32.totalorder %s34, 0
      %p334 = por %p332, %p333
      %s336 = sadd.s32 %s335, 1
      %p339 = scmp.eq.s32.totalorder %s28, 1
      %p340 = scmp.ne.s32.totalorder %s335, %s337
      %p341 = scmp.eq.s32.totalorder %s28, 0
      %p342 = por %p340, %p341
      %p343 = scmp.ne.s32.totalorder %s335, %s337
      %p344 = scmp.eq.s32.totalorder %s33, 1
      %p345 = por %p343, %p344
      %p346 = scmp.ne.s32.totalorder %s337, %s338
      %p347 = scmp.eq.s32.totalorder %s33, 0
      %p348 = por %p346, %p347
      %p349 = scmp.ne.s32.totalorder %s337, %s338
      %p350 = scmp.eq.s32.totalorder %s34, 1
      %p351 = por %p349, %p350
      %p353 = scmp.ne.s32.totalorder %s338, %s352
      %p354 = scmp.eq.s32.totalorder %s34, 0
      %p355 = por %p353, %p354
      %s357 = sadd.s32 %s356, 1
      %p360 = scmp.eq.s32.totalorder %s28, 1
      %p361 = scmp.ne.s32.totalorder %s356, %s358
      %p362 = scmp.eq.s32.totalorder %s28, 0
      %p363 = por %p361, %p362
      %p364 = scmp.ne.s32.totalorder %s356, %s358
      %p365 = scmp.eq.s32.totalorder %s33, 1
      %p366 = por %p364, %p365
      %p367 = scmp.ne.s32.totalorder %s358, %s359
      %p368 = scmp.eq.s32.totalorder %s33, 0
      %p369 = por %p367, %p368
      %p370 = scmp.ne.s32.totalorder %s358, %s359
      %p371 = scmp.eq.s32.totalorder %s34, 1
      %p372 = por %p370, %p371
      %p374 = scmp.ne.s32.totalorder %s359, %s373
      %p375 = scmp.eq.s32.totalorder %s34, 0
      %p376 = por %p374, %p375
      %s378 = sadd.s32 %s377, 1
      %p381 = scmp.eq.s32.totalorder %s28, 1
      %p382 = scmp.ne.s32.totalorder %s377, %s379
      %p383 = scmp.eq.s32.totalorder %s28, 0
      %p384 = por %p382, %p383
      %p385 = scmp.ne.s32.totalorder %s377, %s379
      %p386 = scmp.eq.s32.totalorder %s33, 1
      %p387 = por %p385, %p386
      %p388 = scmp.ne.s32.totalorder %s379, %s380
      %p389 = scmp.eq.s32.totalorder %s33, 0
      %p390 = por %p388, %p389
      %p391 = scmp.ne.s32.totalorder %s379, %s380
      %p392 = scmp.eq.s32.totalorder %s34, 1
      %p393 = por %p391, %p392
      %p395 = scmp.ne.s32.totalorder %s380, %s394
      %p396 = scmp.eq.s32.totalorder %s34, 0
      %p397 = por %p395, %p396
      %s399 = sadd.s32 %s398, 1
      %p402 = scmp.eq.s32.totalorder %s28, 1
      %p403 = scmp.ne.s32.totalorder %s398, %s400
      %p404 = scmp.eq.s32.totalorder %s28, 0
      %p405 = por %p403, %p404
      %p406 = scmp.ne.s32.totalorder %s398, %s400
      %p407 = scmp.eq.s32.totalorder %s33, 1
      %p408 = por %p406, %p407
      %p409 = scmp.ne.s32.totalorder %s400, %s401
      %p410 = scmp.eq.s32.totalorder %s33, 0
      %p411 = por %p409, %p410
      %p412 = scmp.ne.s32.totalorder %s400, %s401
      %p413 = scmp.eq.s32.totalorder %s34, 1
      %p414 = por %p412, %p413
      %p416 = scmp.ne.s32.totalorder %s401, %s415
      %p417 = scmp.eq.s32.totalorder %s34, 0
      %p418 = por %p416, %p417
      %s420 = sadd.s32 %s419, 1
      %p423 = scmp.eq.s32.totalorder %s28, 1
      %p424 = scmp.ne.s32.totalorder %s419, %s421
      %p425 = scmp.eq.s32.totalorder %s28, 0
      %p426 = por %p424, %p425
      %p427 = scmp.ne.s32.totalorder %s419, %s421
      %p428 = scmp.eq.s32.totalorder %s33, 1
      %p429 = por %p427, %p428
      %p430 = scmp.ne.s32.totalorder %s421, %s422
      %p431 = scmp.eq.s32.totalorder %s33, 0
      %p432 = por %p430, %p431
      %p433 = scmp.ne.s32.totalorder %s421, %s422
      %p434 = scmp.eq.s32.totalorder %s34, 1
      %p435 = por %p433, %p434
      %p437 = scmp.ne.s32.totalorder %s422, %s436
      %p438 = scmp.eq.s32.totalorder %s34, 0
      %p439 = por %p437, %p438
      %s440 = ssub.s32 %s28, %s35
      %p441 = scmp.eq.s32.totalorder %s440, 0
      %s443 = sadd.s32 %s442, 1
      %s444 = scalar_select %p441, %s442, %s443
      %p447 = pneg %p441
      %p448 = scmp.eq.s32.totalorder %s28, 1
      %p449 = por %p447, %p448
      %p450 = scmp.ne.s32.totalorder %s442, %s445
      %p451 = scmp.eq.s32.totalorder %s28, 0
      %p452 = por %p450, %p451
      %p453 = scmp.ne.s32.totalorder %s442, %s445
      %p454 = scmp.eq.s32.totalorder %s33, 1
      %p455 = por %p453, %p454
      %p456 = scmp.ne.s32.totalorder %s445, %s446
      %p457 = scmp.eq.s32.totalorder %s33, 0
      %p458 = por %p456, %p457
      %p459 = scmp.ne.s32.totalorder %s445, %s446
      %p460 = scmp.eq.s32.totalorder %s34, 1
      %p461 = por %p459, %p460
      %p463 = scmp.ne.s32.totalorder %s446, %s462
      %p464 = scmp.eq.s32.totalorder %s34, 0
      %p465 = por %p463, %p464
      %p466 = scmp.le.s32.totalorder 1, %s28
      %p467 = scmp.lt.s32.totalorder %s28, 3
      %p468 = pnand %p466, %p467
      %p469 = pneg %p468
      // Predicated region
      $region9: #{basic_conv_forward.1} parent=5 // pred_check
        _
      $region10: #{basic_conv_forward.1} parent=5 // pred_check_branch
        %471 = sbr.rel (%p468) target = $region12
      $region11: #{basic_conv_forward.1} parent=5 // pred_region
        %s472 = ssub.s32 %s28, 1
        // Predicated region
        $region13: #{basic_conv_forward.1} parent=11 // pred_check
          %p473 = pneg %p75
        $region14: #{basic_conv_forward.1} parent=11 // pred_check_branch
          %475 = sbr.rel (%p473) target = $region16
        $region15: #{basic_conv_forward.1} parent=11 // pred_region
          _
        $region16: #{basic_conv_forward.1} parent=11 // pred_fallthru
          _
        // Predicated region
        $region17: #{basic_conv_forward.1} parent=11 // pred_check
          %p476 = pneg %p96
        $region18: #{basic_conv_forward.1} parent=11 // pred_check_branch
          %478 = sbr.rel (%p476) target = $region20
        $region19: #{basic_conv_forward.1} parent=11 // pred_region
          _
        $region20: #{basic_conv_forward.1} parent=11 // pred_fallthru
          _
        // Predicated region
        $region21: #{basic_conv_forward.1} parent=11 // pred_check
          %p479 = pneg %p117
        $region22: #{basic_conv_forward.1} parent=11 // pred_check_branch
          %481 = sbr.rel (%p479) target = $region24
        $region23: #{basic_conv_forward.1} parent=11 // pred_region
          _
        $region24: #{basic_conv_forward.1} parent=11 // pred_fallthru
          _
        // Predicated region
        $region25: #{basic_conv_forward.1} parent=11 // pred_check
          %p482 = pneg %p138
        $region26: #{basic_conv_forward.1} parent=11 // pred_check_branch
          %484 = sbr.rel (%p482) target = $region28
        $region27: #{basic_conv_forward.1} parent=11 // pred_region
          _
        $region28: #{basic_conv_forward.1} parent=11 // pred_fallthru
          _
        // Predicated region
        $region29: #{basic_conv_forward.1} parent=11 // pred_check
          %p485 = pneg %p159
        $region30: #{basic_conv_forward.1} parent=11 // pred_check_branch
          %487 = sbr.rel (%p485) target = $region32
        $region31: #{basic_conv_forward.1} parent=11 // pred_region
          _
        $region32: #{basic_conv_forward.1} parent=11 // pred_fallthru
          _
        // Predicated region
        $region33: #{basic_conv_forward.1} parent=11 // pred_check
          %p488 = pneg %p180
        $region34: #{basic_conv_forward.1} parent=11 // pred_check_branch
          %490 = sbr.rel (%p488) target = $region36
        $region35: #{basic_conv_forward.1} parent=11 // pred_region
          _
        $region36: #{basic_conv_forward.1} parent=11 // pred_fallthru
          _
        // Predicated region
        $region37: #{basic_conv_forward.1} parent=11 // pred_check
          %p491 = pneg %p201
        $region38: #{basic_conv_forward.1} parent=11 // pred_check_branch
          %493 = sbr.rel (%p491) target = $region40
        $region39: #{basic_conv_forward.1} parent=11 // pred_region
          _
        $region40: #{basic_conv_forward.1} parent=11 // pred_fallthru
          _
        // Predicated region
        $region41: #{basic_conv_forward.1} parent=11 // pred_check
          %p494 = pneg %p222
        $region42: #{basic_conv_forward.1} parent=11 // pred_check_branch
          %496 = sbr.rel (%p494) target = $region44
        $region43: #{basic_conv_forward.1} parent=11 // pred_region
          _
        $region44: #{basic_conv_forward.1} parent=11 // pred_fallthru
          _
        // Predicated region
        $region45: #{basic_conv_forward.1} parent=11 // pred_check
          %p497 = pneg %p243
        $region46: #{basic_conv_forward.1} parent=11 // pred_check_branch
          %499 = sbr.rel (%p497) target = $region48
        $region47: #{basic_conv_forward.1} parent=11 // pred_region
          _
        $region48: #{basic_conv_forward.1} parent=11 // pred_fallthru
          _
        // Predicated region
        $region49: #{basic_conv_forward.1} parent=11 // pred_check
          %p500 = pneg %p264
        $region50: #{basic_conv_forward.1} parent=11 // pred_check_branch
          %502 = sbr.rel (%p500) target = $region52
        $region51: #{basic_conv_forward.1} parent=11 // pred_region
          _
        $region52: #{basic_conv_forward.1} parent=11 // pred_fallthru
          _
        // Predicated region
        $region53: #{basic_conv_forward.1} parent=11 // pred_check
          %p503 = pneg %p285
        $region54: #{basic_conv_forward.1} parent=11 // pred_check_branch
          %505 = sbr.rel (%p503) target = $region56
        $region55: #{basic_conv_forward.1} parent=11 // pred_region
          _
        $region56: #{basic_conv_forward.1} parent=11 // pred_fallthru
          _
        // Predicated region
        $region57: #{basic_conv_forward.1} parent=11 // pred_check
          %p506 = pneg %p306
        $region58: #{basic_conv_forward.1} parent=11 // pred_check_branch
          %508 = sbr.rel (%p506) target = $region60
        $region59: #{basic_conv_forward.1} parent=11 // pred_region
          _
        $region60: #{basic_conv_forward.1} parent=11 // pred_fallthru
          _
        // Predicated region
        $region61: #{basic_conv_forward.1} parent=11 // pred_check
          %p509 = pneg %p327
        $region62: #{basic_conv_forward.1} parent=11 // pred_check_branch
          %511 = sbr.rel (%p509) target = $region64
        $region63: #{basic_conv_forward.1} parent=11 // pred_region
          _
        $region64: #{basic_conv_forward.1} parent=11 // pred_fallthru
          _
        // Predicated region
        $region65: #{basic_conv_forward.1} parent=11 // pred_check
          %p512 = pneg %p348
        $region66: #{basic_conv_forward.1} parent=11 // pred_check_branch
          %514 = sbr.rel (%p512) target = $region68
        $region67: #{basic_conv_forward.1} parent=11 // pred_region
          _
        $region68: #{basic_conv_forward.1} parent=11 // pred_fallthru
          _
        // Predicated region
        $region69: #{basic_conv_forward.1} parent=11 // pred_check
          %p515 = pneg %p369
        $region70: #{basic_conv_forward.1} parent=11 // pred_check_branch
          %517 = sbr.rel (%p515) target = $region72
        $region71: #{basic_conv_forward.1} parent=11 // pred_region
          _
        $region72: #{basic_conv_forward.1} parent=11 // pred_fallthru
          _
        // Predicated region
        $region73: #{basic_conv_forward.1} parent=11 // pred_check
          %p518 = pneg %p390
        $region74: #{basic_conv_forward.1} parent=11 // pred_check_branch
          %520 = sbr.rel (%p518) target = $region76
        $region75: #{basic_conv_forward.1} parent=11 // pred_region
          _
        $region76: #{basic_conv_forward.1} parent=11 // pred_fallthru
          _
        // Predicated region
        $region77: #{basic_conv_forward.1} parent=11 // pred_check
          %p521 = pneg %p411
        $region78: #{basic_conv_forward.1} parent=11 // pred_check_branch
          %523 = sbr.rel (%p521) target = $region80
        $region79: #{basic_conv_forward.1} parent=11 // pred_region
          _
        $region80: #{basic_conv_forward.1} parent=11 // pred_fallthru
          _
        // Predicated region
        $region81: #{basic_conv_forward.1} parent=11 // pred_check
          %p524 = pneg %p432
        $region82: #{basic_conv_forward.1} parent=11 // pred_check_branch
          %526 = sbr.rel (%p524) target = $region84
        $region83: #{basic_conv_forward.1} parent=11 // pred_region
          _
        $region84: #{basic_conv_forward.1} parent=11 // pred_fallthru
          _
      $region12: #{basic_conv_forward.1} parent=5 // pred_fallthru
        _
      %p527 = scmp.lt.s32.totalorder %s28, 2
      // Predicated region
      $region85: #{basic_conv_forward.1} parent=5 // pred_check
        %p528 = pneg %p527
      $region86: #{basic_conv_forward.1} parent=5 // pred_check_branch
        %530 = sbr.rel (%p528) target = $region88
      $region87: #{basic_conv_forward.1} parent=5 // pred_region
        // Predicated region
        $region89: #{basic_conv_forward.1} parent=87 // pred_check
          %p531 = pneg %p48
        $region90: #{basic_conv_forward.1} parent=87 // pred_check_branch
          %533 = sbr.rel (%p531) target = $region92
        $region91: #{basic_conv_forward.1} parent=87 // pred_region
          %s534 = smul.u32 4, %s28
          %p535 = scmp.lt.s32.totalorder %s534, 7
          %s536 = scalar_select %p535, %s534, 7
          %s537 = smul.addr %s536, 8
          %s538 = scalar_lea.vmem %s0, %s537
          %s539 = smul.u32 4, %s28
        $region92: #{basic_conv_forward.1} parent=87 // pred_fallthru
          _
      $region88: #{basic_conv_forward.1} parent=5 // pred_fallthru
        _
      %p540 = scmp.le.s32.totalorder 1, %s28
      %p541 = scmp.lt.s32.totalorder %s28, 3
      %p542 = pnand %p540, %p541
      %p543 = pneg %p542
      // Predicated region
      $region93: #{basic_conv_forward.1} parent=5 // pred_check
        _
      $region94: #{basic_conv_forward.1} parent=5 // pred_check_branch
        %545 = sbr.rel (%p542) target = $region96
      $region95: #{basic_conv_forward.1} parent=5 // pred_region
        %s546 = ssub.s32 %s28, 1
        %s547 = smul.u32 4, %s33
        %p548 = scmp.lt.s32.totalorder %s547, 7
        %s549 = scalar_select %p548, %s547, 7
        %s550 = smul.addr %s549, 8
        %s551 = scalar_lea.vmem %s0, %s550
        %p552 = pneg %p54
        %p553 = pneg %p51
        %p554 = pneg %p75
        %p555 = pneg %p72
        %p556 = pneg %p96
        %p557 = pneg %p93
        %p558 = pneg %p117
        %p559 = pneg %p114
        %p560 = pneg %p138
        %p561 = pneg %p135
        %p562 = pneg %p159
        %p563 = pneg %p156
        %p564 = pneg %p180
        %p565 = pneg %p177
        %p566 = pneg %p201
        %p567 = pneg %p198
        %p568 = pneg %p222
        %p569 = pneg %p219
        %p570 = pneg %p243
        %p571 = pneg %p240
        %p572 = pneg %p264
        %p573 = pneg %p261
        %p574 = pneg %p285
        %p575 = pneg %p282
        %p576 = pneg %p306
        %p577 = pneg %p303
        %p578 = pneg %p327
        %p579 = pneg %p324
        %p580 = pneg %p348
        %p581 = pneg %p345
        %p582 = pneg %p369
        %p583 = pneg %p366
        %p584 = pneg %p390
        %p585 = pneg %p387
        %p586 = pneg %p411
        %p587 = pneg %p408
        %p588 = pneg %p432
        %p589 = pneg %p429
        %p590 = pneg %p458
        %p591 = pneg %p455
        %s592 = sand.u32 %s445, 1
        %s593 = scalar_lea.sflag [#allocation3], %s592
        %s594 = sand.u32 %s445, 1
        %s595 = scalar_lea.vmem [#allocation2], %s594
        %s596 = smul.u32 4, %s33
        %p597 = scmp.lt.s32.totalorder %s596, 7
        %s598 = scalar_select %p597, %s596, 7
        %s599 = smul.addr %s598, 8
        %s600 = scalar_lea.vmem %s0, %s599
        %s601 = smul.u32 4, %s33
        %v602 = vld [vmem:[%s600] sm:$0xff]
        %v603 = vld [vmem:[%s600 + $0x8] sm:$0xff]
        %v604 = vld [vmem:[%s600 + $0x10] sm:$0xff]
        %v605 = vld [vmem:[%s600 + $0x18] sm:$0xff]
        %v606 = vld [vmem:[%s1] sm:$0xff]
        %v607 = vld [vmem:[%s1 + $0x8] sm:$0xff]
        %v608 = vld [vmem:[%s1 + $0x10] sm:$0xff]
        %v609 = vld [vmem:[%s1 + $0x18] sm:$0xff]
        %v610 = vld [vmem:[%s1 + $0x20] sm:$0xff]
        %v611 = vld [vmem:[%s1 + $0x28] sm:$0xff]
        %v612 = vld [vmem:[%s1 + $0x30] sm:$0xff]
        %v613 = vld [vmem:[%s1 + $0x38] sm:$0xff]
        %v614 = vld [vmem:[%s1 + $0x40] sm:$0xff]
        %v615 = vld [vmem:[%s1 + $0x48] sm:$0xff]
        %v616 = vld [vmem:[%s1 + $0x50] sm:$0xff]
        %v617 = vld [vmem:[%s1 + $0x58] sm:$0xff]
        %v618 = vld [vmem:[%s1 + $0x60] sm:$0xff]
        %v619 = vld [vmem:[%s1 + $0x68] sm:$0xff]
        %v620 = vld [vmem:[%s1 + $0x70] sm:$0xff]
        %v621 = vld [vmem:[%s1 + $0x78] sm:$0xff]
        %622 = vmatprep.subr.mxu0 0.0
        %623 = vmatpush1.msra.mxu0 %v606
        %624 = vmatprep.subr.mxu0 0.0
        %625 = vmatpush1.msra.mxu0 %v607
        %626 = vmatprep.subr.mxu0 0.0
        %627 = vmatpush1.msra.mxu0 %v608
        %628 = vmatprep.subr.mxu0 0.0
        %629 = vmatpush1.msra.mxu0 %v609
        %630 = vmatprep.subr.mxu0 0.0
        %631 = vmatpush1.msra.mxu0 %v610
        %632 = vmatprep.subr.mxu0 0.0
        %633 = vmatpush1.msra.mxu0 %v611
        %634 = vmatprep.subr.mxu0 0.0
        %635 = vmatpush1.msra.mxu0 %v612
        %636 = vmatprep.subr.mxu0 0.0
        %637 = vmatpush1.msra.mxu0 %v613
        %638 = vmatprep.subr.mxu0 0.0
        %639 = vmatpush1.msra.mxu0 %v614
        %640 = vmatprep.subr.mxu0 0.0
        %641 = vmatpush1.msra.mxu0 %v615
        %642 = vmatprep.subr.mxu0 0.0
        %643 = vmatpush1.msra.mxu0 %v616
        %644 = vmatprep.subr.mxu0 0.0
        %645 = vmatpush1.msra.mxu0 %v617
        %646 = vmatprep.subr.mxu0 0.0
        %647 = vmatpush1.msra.mxu0 %v618
        %648 = vmatprep.subr.mxu0 0.0
        %649 = vmatpush1.msra.mxu0 %v619
        %650 = vmatprep.subr.mxu0 0.0
        %651 = vmatpush1.msra.mxu0 %v620
        %652 = vmatprep.subr.mxu0 0.0
        %653 = vmatpush1.msra.mxu0 %v621
        %654 = vmatprep.subr.mxu0 0.0
        %655 = vmatpush1.msra.mxu0 0.0
        %656 = vmatprep.subr.mxu0 0.0
        %657 = vmatpush1.msra.mxu0 0.0
        %658 = vmatprep.subr.mxu0 0.0
        %659 = vmatpush1.msra.mxu0 0.0
        %660 = vmatprep.subr.mxu0 0.0
        %661 = vmatpush1.msra.mxu0 0.0
        %662 = vmatprep.subr.mxu0 0.0
        %663 = vmatpush1.msra.mxu0 0.0
        %664 = vmatprep.subr.mxu0 0.0
        %665 = vmatpush1.msra.mxu0 0.0
        %666 = vmatprep.subr.mxu0 0.0
        %667 = vmatpush1.msra.mxu0 0.0
        %668 = vmatprep.subr.mxu0 0.0
        %669 = vmatpush1.msra.mxu0 0.0
        %670 = vmatprep.subr.mxu0 0.0
        %671 = vmatpush1.msra.mxu0 0.0
        %672 = vmatprep.subr.mxu0 0.0
        %673 = vmatpush1.msra.mxu0 0.0
        %674 = vmatprep.subr.mxu0 0.0
        %675 = vmatpush1.msra.mxu0 0.0
        %676 = vmatprep.subr.mxu0 0.0
        %677 = vmatpush1.msra.mxu0 0.0
        %678 = vmatprep.subr.mxu0 0.0
        %679 = vmatpush1.msra.mxu0 0.0
        %680 = vmatprep.subr.mxu0 0.0
        %681 = vmatpush1.msra.mxu0 0.0
        %682 = vmatprep.subr.mxu0 0.0
        %683 = vmatpush1.msra.mxu0 0.0
        %684 = vmatprep.subr.mxu0 0.0
        %685 = vmatpush1.msra.mxu0 0.0
        %686 = vmatprep.mubr.f32.mxu0 0.0
        %687 = vmatmul.mubr.f32.gmra.mrb[0].mxu0 %v602
        %v688 = vpop.f32.mrb[0].mxu0
        %v689 = vadd.f32 0.0, %v688
        %v690 = vpop.f32.mrb[0].mxu0
        %691 = vmatprep.mubr.f32.mxu0 0.0
        %692 = vmatmul.mubr.f32.gmra.mrb[0].mxu0 %v603
        %v693 = vpop.f32.mrb[0].mxu0
        %v694 = vadd.f32 0.0, %v693
        %v695 = vpop.f32.mrb[0].mxu0
        %696 = vmatprep.mubr.f32.mxu0 0.0
        %697 = vmatmul.mubr.f32.gmra.mrb[0].mxu0 %v604
        %v698 = vpop.f32.mrb[0].mxu0
        %v699 = vadd.f32 0.0, %v698
        %v700 = vpop.f32.mrb[0].mxu0
        %701 = vmatprep.mubr.f32.mxu0 0.0
        %702 = vmatmul.mubr.f32.gmra.mrb[0].mxu0 %v605
        %v703 = vpop.f32.mrb[0].mxu0
        %v704 = vadd.f32 0.0, %v703
        %v705 = vpop.f32.mrb[0].mxu0
        %706 = vdwg.mxu0
        %v707 = vld [vmem:[%s2] sm:$0x1]
        %v709 = vlaneseq
        %v710 = vshrl.u32 %v709, 7
        %v711 = vsub.s32 0, %v710
        %v712 = vrot.slane %v707, %v711
        %v714 = vmul.f32 %v689, %v712
        %v715 = vmul.f32 %v694, %v712
        %v716 = vmul.f32 %v699, %v712
        %v717 = vmul.f32 %v704, %v712
        %v718 = vld [vmem:[%s3] sm:$0x1]
        %v720 = vlaneseq
        %v721 = vshrl.u32 %v720, 7
        %v722 = vsub.s32 0, %v721
        %v723 = vrot.slane %v718, %v722
        %v725 = vadd.f32 %v714, %v723
        %v726 = vadd.f32 %v715, %v723
        %v727 = vadd.f32 %v716, %v723
        %v728 = vadd.f32 %v717, %v723
        %vm729 = vcmp.gt.f32.partialorder %v725, 0.0
        %vm730 = vcmp.gt.f32.partialorder %v726, 0.0
        %vm731 = vcmp.gt.f32.partialorder %v727, 0.0
        %vm732 = vcmp.gt.f32.partialorder %v728, 0.0
        %v733 = vmin.f32 %v725, 0.0
        %v734 = vmin.f32 %v726, 0.0
        %v735 = vmin.f32 %v727, 0.0
        %v736 = vmin.f32 %v728, 0.0
        %v737 = vmul.f32 %v733, 1.442695
        %v738 = vpow.pop %v737
        %v739 = vmul.f32 %v734, 1.442695
        %v740 = vpow.pop %v739
        %v741 = vmul.f32 %v735, 1.442695
        %v742 = vpow.pop %v741
        %v743 = vmul.f32 %v736, 1.442695
        %v744 = vpow.pop %v743
        %v745 = vsub.f32 %v738, 1.0
        %v746 = vsub.f32 %v740, 1.0
        %v747 = vsub.f32 %v742, 1.0
        %v748 = vsub.f32 %v744, 1.0
        %v749 = vsel %vm729, %v725, %v745
        %v750 = vsel %vm730, %v726, %v746
        %v751 = vsel %vm731, %v727, %v747
        %v752 = vsel %vm732, %v728, %v748
        %v753 = vld [vmem:[%s4] sm:$0xff]
        %v754 = vld [vmem:[%s4 + $0x8] sm:$0x3f]
        %vm755 = vcmask 236544
        %v757 = vsel %vm755, %v753, 0
        %v760 = vsel %vm755, %v754, 0
        %vm762 = vcmask 1044480
        %v764 = vsel %vm762, %v752, 0
        %766 = vmatprep.subr.mxu0 0.0
        %767 = vmatpush1.msra.mxu0 %v749
        %768 = vmatprep.subr.mxu0 0.0
        %769 = vmatpush1.msra.mxu0 %v750
        %770 = vmatprep.subr.mxu0 0.0
        %771 = vmatpush1.msra.mxu0 %v751
        %772 = vmatprep.subr.mxu0 0.0
        %773 = vmatpush1.msra.mxu0 %v764
        %774 = vmatprep.subr.mxu0 0.0
        %775 = vmatpush1.msra.mxu0 0.0
        %776 = vmatprep.subr.mxu0 0.0
        %777 = vmatpush1.msra.mxu0 0.0
        %778 = vmatprep.subr.mxu0 0.0
        %779 = vmatpush1.msra.mxu0 0.0
        %780 = vmatprep.subr.mxu0 0.0
        %781 = vmatpush1.msra.mxu0 0.0
        %782 = vmatprep.subr.mxu0 0.0
        %783 = vmatpush1.msra.mxu0 0.0
        %784 = vmatprep.subr.mxu0 0.0
        %785 = vmatpush1.msra.mxu0 0.0
        %786 = vmatprep.subr.mxu0 0.0
        %787 = vmatpush1.msra.mxu0 0.0
        %788 = vmatprep.subr.mxu0 0.0
        %789 = vmatpush1.msra.mxu0 0.0
        %790 = vmatprep.subr.mxu0 0.0
        %791 = vmatpush1.msra.mxu0 0.0
        %792 = vmatprep.subr.mxu0 0.0
        %793 = vmatpush1.msra.mxu0 0.0
        %794 = vmatprep.subr.mxu0 0.0
        %795 = vmatpush1.msra.mxu0 0.0
        %796 = vmatprep.subr.mxu0 0.0
        %797 = vmatpush1.msra.mxu0 0.0
        %798 = vmatprep.subr.mxu0 0.0
        %799 = vmatpush1.msra.mxu0 0.0
        %800 = vmatprep.subr.mxu0 0.0
        %801 = vmatpush1.msra.mxu0 0.0
        %802 = vmatprep.subr.mxu0 0.0
        %803 = vmatpush1.msra.mxu0 0.0
        %804 = vmatprep.subr.mxu0 0.0
        %805 = vmatpush1.msra.mxu0 0.0
        %806 = vmatprep.subr.mxu0 0.0
        %807 = vmatpush1.msra.mxu0 0.0
        %808 = vmatprep.subr.mxu0 0.0
        %809 = vmatpush1.msra.mxu0 0.0
        %810 = vmatprep.subr.mxu0 0.0
        %811 = vmatpush1.msra.mxu0 0.0
        %812 = vmatprep.subr.mxu0 0.0
        %813 = vmatpush1.msra.mxu0 0.0
        %814 = vmatprep.subr.mxu0 0.0
        %815 = vmatpush1.msra.mxu0 0.0
        %816 = vmatprep.subr.mxu0 0.0
        %817 = vmatpush1.msra.mxu0 0.0
        %818 = vmatprep.subr.mxu0 0.0
        %819 = vmatpush1.msra.mxu0 0.0
        %820 = vmatprep.subr.mxu0 0.0
        %821 = vmatpush1.msra.mxu0 0.0
        %822 = vmatprep.subr.mxu0 0.0
        %823 = vmatpush1.msra.mxu0 0.0
        %824 = vmatprep.subr.mxu0 0.0
        %825 = vmatpush1.msra.mxu0 0.0
        %826 = vmatprep.subr.mxu0 0.0
        %827 = vmatpush1.msra.mxu0 0.0
        %828 = vmatprep.subr.mxu0 0.0
        %829 = vmatpush1.msra.mxu0 0.0
        %830 = vmatprep.mubr.f32.mxu0 0.0
        %831 = vmatmul.mubr.f32.gmra.mrb[0].mxu0 %v757
        %v832 = vpop.f32.mrb[0].mxu0
        %v833 = vadd.f32 0.0, %v832
        %v834 = vpop.f32.mrb[0].mxu0
        %835 = vmatprep.mubr.f32.mxu0 0.0
        %836 = vmatmul.mubr.f32.gmra.mrb[0].mxu0 %v760
        %v837 = vpop.f32.mrb[0].mxu0
        %v838 = vadd.f32 0.0, %v837
        %v839 = vpop.f32.mrb[0].mxu0
        %840 = vdwg.mxu0
        %s841 = scalar_lea.vmem %s4, 16
        %v842 = vld [vmem:[%s841] sm:$0xff]
        %v843 = vld [vmem:[%s841 + $0x8] sm:$0x3f]
        %v845 = vsel %vm755, %v842, 0
        %v848 = vsel %vm755, %v843, 0
        %850 = vmatprep.subr.mxu0 0.0
        %851 = vmatpush1.msra.mxu0 %v749
        %852 = vmatprep.subr.mxu0 0.0
        %853 = vmatpush1.msra.mxu0 %v750
        %854 = vmatprep.subr.mxu0 0.0
        %855 = vmatpush1.msra.mxu0 %v751
        %856 = vmatprep.subr.mxu0 0.0
        %857 = vmatpush1.msra.mxu0 %v764
        %858 = vmatprep.subr.mxu0 0.0
        %859 = vmatpush1.msra.mxu0 0.0
        %860 = vmatprep.subr.mxu0 0.0
        %861 = vmatpush1.msra.mxu0 0.0
        %862 = vmatprep.subr.mxu0 0.0
        %863 = vmatpush1.msra.mxu0 0.0
        %864 = vmatprep.subr.mxu0 0.0
        %865 = vmatpush1.msra.mxu0 0.0
        %866 = vmatprep.subr.mxu0 0.0
        %867 = vmatpush1.msra.mxu0 0.0
        %868 = vmatprep.subr.mxu0 0.0
        %869 = vmatpush1.msra.mxu0 0.0
        %870 = vmatprep.subr.mxu0 0.0
        %871 = vmatpush1.msra.mxu0 0.0
        %872 = vmatprep.subr.mxu0 0.0
        %873 = vmatpush1.msra.mxu0 0.0
        %874 = vmatprep.subr.mxu0 0.0
        %875 = vmatpush1.msra.mxu0 0.0
        %876 = vmatprep.subr.mxu0 0.0
        %877 = vmatpush1.msra.mxu0 0.0
        %878 = vmatprep.subr.mxu0 0.0
        %879 = vmatpush1.msra.mxu0 0.0
        %880 = vmatprep.subr.mxu0 0.0
        %881 = vmatpush1.msra.mxu0 0.0
        %882 = vmatprep.subr.mxu0 0.0
        %883 = vmatpush1.msra.mxu0 0.0
        %884 = vmatprep.subr.mxu0 0.0
        %885 = vmatpush1.msra.mxu0 0.0
        %886 = vmatprep.subr.mxu0 0.0
        %887 = vmatpush1.msra.mxu0 0.0
        %888 = vmatprep.subr.mxu0 0.0
        %889 = vmatpush1.msra.mxu0 0.0
        %890 = vmatprep.subr.mxu0 0.0
        %891 = vmatpush1.msra.mxu0 0.0
        %892 = vmatprep.subr.mxu0 0.0
        %893 = vmatpush1.msra.mxu0 0.0
        %894 = vmatprep.subr.mxu0 0.0
        %895 = vmatpush1.msra.mxu0 0.0
        %896 = vmatprep.subr.mxu0 0.0
        %897 = vmatpush1.msra.mxu0 0.0
        %898 = vmatprep.subr.mxu0 0.0
        %899 = vmatpush1.msra.mxu0 0.0
        %900 = vmatprep.subr.mxu0 0.0
        %901 = vmatpush1.msra.mxu0 0.0
        %902 = vmatprep.subr.mxu0 0.0
        %903 = vmatpush1.msra.mxu0 0.0
        %904 = vmatprep.subr.mxu0 0.0
        %905 = vmatpush1.msra.mxu0 0.0
        %906 = vmatprep.subr.mxu0 0.0
        %907 = vmatpush1.msra.mxu0 0.0
        %908 = vmatprep.subr.mxu0 0.0
        %909 = vmatpush1.msra.mxu0 0.0
        %910 = vmatprep.subr.mxu0 0.0
        %911 = vmatpush1.msra.mxu0 0.0
        %912 = vmatprep.subr.mxu0 0.0
        %913 = vmatpush1.msra.mxu0 0.0
        %914 = vmatprep.mubr.f32.mxu0 0.0
        %915 = vmatmul.mubr.f32.gmra.mrb[0].mxu0 %v845
        %v916 = vpop.f32.mrb[0].mxu0
        %v917 = vadd.f32 0.0, %v916
        %v918 = vpop.f32.mrb[0].mxu0
        %919 = vmatprep.mubr.f32.mxu0 0.0
        %920 = vmatmul.mubr.f32.gmra.mrb[0].mxu0 %v848
        %v921 = vpop.f32.mrb[0].mxu0
        %v922 = vadd.f32 0.0, %v921
        %v923 = vpop.f32.mrb[0].mxu0
        %924 = vdwg.mxu0
        %v925 = vmax.f32 %v833, %v917
        %v926 = vmax.f32 %v838, %v922
        %s927 = scalar_lea.vmem %s4, 32
        %v928 = vld [vmem:[%s927] sm:$0xff]
        %v929 = vld [vmem:[%s927 + $0x8] sm:$0x3f]
        %v931 = vsel %vm755, %v928, 0
        %v934 = vsel %vm755, %v929, 0
        %936 = vmatprep.subr.mxu0 0.0
        %937 = vmatpush1.msra.mxu0 %v749
        %938 = vmatprep.subr.mxu0 0.0
        %939 = vmatpush1.msra.mxu0 %v750
        %940 = vmatprep.subr.mxu0 0.0
        %941 = vmatpush1.msra.mxu0 %v751
        %942 = vmatprep.subr.mxu0 0.0
        %943 = vmatpush1.msra.mxu0 %v764
        %944 = vmatprep.subr.mxu0 0.0
        %945 = vmatpush1.msra.mxu0 0.0
        %946 = vmatprep.subr.mxu0 0.0
        %947 = vmatpush1.msra.mxu0 0.0
        %948 = vmatprep.subr.mxu0 0.0
        %949 = vmatpush1.msra.mxu0 0.0
        %950 = vmatprep.subr.mxu0 0.0
        %951 = vmatpush1.msra.mxu0 0.0
        %952 = vmatprep.subr.mxu0 0.0
        %953 = vmatpush1.msra.mxu0 0.0
        %954 = vmatprep.subr.mxu0 0.0
        %955 = vmatpush1.msra.mxu0 0.0
        %956 = vmatprep.subr.mxu0 0.0
        %957 = vmatpush1.msra.mxu0 0.0
        %958 = vmatprep.subr.mxu0 0.0
        %959 = vmatpush1.msra.mxu0 0.0
        %960 = vmatprep.subr.mxu0 0.0
        %961 = vmatpush1.msra.mxu0 0.0
        %962 = vmatprep.subr.mxu0 0.0
        %963 = vmatpush1.msra.mxu0 0.0
        %964 = vmatprep.subr.mxu0 0.0
        %965 = vmatpush1.msra.mxu0 0.0
        %966 = vmatprep.subr.mxu0 0.0
        %967 = vmatpush1.msra.mxu0 0.0
        %968 = vmatprep.subr.mxu0 0.0
        %969 = vmatpush1.msra.mxu0 0.0
        %970 = vmatprep.subr.mxu0 0.0
        %971 = vmatpush1.msra.mxu0 0.0
        %972 = vmatprep.subr.mxu0 0.0
        %973 = vmatpush1.msra.mxu0 0.0
        %974 = vmatprep.subr.mxu0 0.0
        %975 = vmatpush1.msra.mxu0 0.0
        %976 = vmatprep.subr.mxu0 0.0
        %977 = vmatpush1.msra.mxu0 0.0
        %978 = vmatprep.subr.mxu0 0.0
        %979 = vmatpush1.msra.mxu0 0.0
        %980 = vmatprep.subr.mxu0 0.0
        %981 = vmatpush1.msra.mxu0 0.0
        %982 = vmatprep.subr.mxu0 0.0
        %983 = vmatpush1.msra.mxu0 0.0
        %984 = vmatprep.subr.mxu0 0.0
        %985 = vmatpush1.msra.mxu0 0.0
        %986 = vmatprep.subr.mxu0 0.0
        %987 = vmatpush1.msra.mxu0 0.0
        %988 = vmatprep.subr.mxu0 0.0
        %989 = vmatpush1.msra.mxu0 0.0
        %990 = vmatprep.subr.mxu0 0.0
        %991 = vmatpush1.msra.mxu0 0.0
        %992 = vmatprep.subr.mxu0 0.0
        %993 = vmatpush1.msra.mxu0 0.0
        %994 = vmatprep.subr.mxu0 0.0
        %995 = vmatpush1.msra.mxu0 0.0
        %996 = vmatprep.subr.mxu0 0.0
        %997 = vmatpush1.msra.mxu0 0.0
        %998 = vmatprep.subr.mxu0 0.0
        %999 = vmatpush1.msra.mxu0 0.0
        %1000 = vmatprep.mubr.f32.mxu0 0.0
        %1001 = vmatmul.mubr.f32.gmra.mrb[0].mxu0 %v931
        %v1002 = vpop.f32.mrb[0].mxu0
        %v1003 = vadd.f32 0.0, %v1002
        %v1004 = vpop.f32.mrb[0].mxu0
        %1005 = vmatprep.mubr.f32.mxu0 0.0
        %1006 = vmatmul.mubr.f32.gmra.mrb[0].mxu0 %v934
        %v1007 = vpop.f32.mrb[0].mxu0
        %v1008 = vadd.f32 0.0, %v1007
        %v1009 = vpop.f32.mrb[0].mxu0
        %1010 = vdwg.mxu0
        %v1011 = vmax.f32 %v925, %v1003
        %v1012 = vmax.f32 %v926, %v1008
        %v1013 = vld [vmem:[%s5] sm:$0xff]
        %v1014 = vld [vmem:[%s5 + $0x8] sm:$0xff]
        %v1015 = vld [vmem:[%s5 + $0x10] sm:$0xff]
        %v1016 = vld [vmem:[%s5 + $0x18] sm:$0xff]
        %v1017 = vld [vmem:[%s5 + $0x20] sm:$0xff]
        %v1018 = vld [vmem:[%s5 + $0x28] sm:$0xff]
        %v1019 = vld [vmem:[%s5 + $0x30] sm:$0xff]
        %v1020 = vld [vmem:[%s5 + $0x38] sm:$0xff]
        %s1021 = scalar_lea.vmem %s5, 64
        %v1022 = vld [vmem:[%s1021] sm:$0xff]
        %v1023 = vld [vmem:[%s1021 + $0x8] sm:$0xff]
        %v1024 = vld [vmem:[%s1021 + $0x10] sm:$0xff]
        %v1025 = vld [vmem:[%s1021 + $0x18] sm:$0xff]
        %v1026 = vld [vmem:[%s1021 + $0x20] sm:$0xff]
        %v1027 = vld [vmem:[%s1021 + $0x28] sm:$0xff]
        %v1028 = vld [vmem:[%s1021 + $0x30] sm:$0xff]
        %v1029 = vld [vmem:[%s1021 + $0x38] sm:$0xff]
        %vm1032 = vcmask 1046528
        %v1033 = vrot.slane %v1011, 1
        %v1034 = vrot.slane %v1012, 1
        %v1035 = vsel %vm1032, %v1033, %v1034
        %vm1036 = vcmask 523264
        %v1037 = vsel %vm1036, %v1035, 0
        %v1039 = vsel %vm1036, %v1034, 0
        %1041 = vmatprep.subr.mxu0 0.0
        %1042 = vmatpush1.msra.mxu0 %v1022
        %1043 = vmatprep.subr.mxu0 0.0
        %1044 = vmatpush1.msra.mxu0 %v1023
        %1045 = vmatprep.subr.mxu0 0.0
        %1046 = vmatpush1.msra.mxu0 %v1024
        %1047 = vmatprep.subr.mxu0 0.0
        %1048 = vmatpush1.msra.mxu0 %v1025
        %1049 = vmatprep.subr.mxu0 0.0
        %1050 = vmatpush1.msra.mxu0 %v1026
        %1051 = vmatprep.subr.mxu0 0.0
        %1052 = vmatpush1.msra.mxu0 %v1027
        %1053 = vmatprep.subr.mxu0 0.0
        %1054 = vmatpush1.msra.mxu0 %v1028
        %1055 = vmatprep.subr.mxu0 0.0
        %1056 = vmatpush1.msra.mxu0 %v1029
        %1057 = vmatprep.subr.mxu0 0.0
        %1058 = vmatpush1.msra.mxu0 0.0
        %1059 = vmatprep.subr.mxu0 0.0
        %1060 = vmatpush1.msra.mxu0 0.0
        %1061 = vmatprep.subr.mxu0 0.0
        %1062 = vmatpush1.msra.mxu0 0.0
        %1063 = vmatprep.subr.mxu0 0.0
        %1064 = vmatpush1.msra.mxu0 0.0
        %1065 = vmatprep.subr.mxu0 0.0
        %1066 = vmatpush1.msra.mxu0 0.0
        %1067 = vmatprep.subr.mxu0 0.0
        %1068 = vmatpush1.msra.mxu0 0.0
        %1069 = vmatprep.subr.mxu0 0.0
        %1070 = vmatpush1.msra.mxu0 0.0
        %1071 = vmatprep.subr.mxu0 0.0
        %1072 = vmatpush1.msra.mxu0 0.0
        %1073 = vmatprep.subr.mxu0 0.0
        %1074 = vmatpush1.msra.mxu0 0.0
        %1075 = vmatprep.subr.mxu0 0.0
        %1076 = vmatpush1.msra.mxu0 0.0
        %1077 = vmatprep.subr.mxu0 0.0
        %1078 = vmatpush1.msra.mxu0 0.0
        %1079 = vmatprep.subr.mxu0 0.0
        %1080 = vmatpush1.msra.mxu0 0.0
        %1081 = vmatprep.subr.mxu0 0.0
        %1082 = vmatpush1.msra.mxu0 0.0
        %1083 = vmatprep.subr.mxu0 0.0
        %1084 = vmatpush1.msra.mxu0 0.0
        %1085 = vmatprep.subr.mxu0 0.0
        %1086 = vmatpush1.msra.mxu0 0.0
        %1087 = vmatprep.subr.mxu0 0.0
        %1088 = vmatpush1.msra.mxu0 0.0
        %1089 = vmatprep.subr.mxu0 0.0
        %1090 = vmatpush1.msra.mxu0 0.0
        %1091 = vmatprep.subr.mxu0 0.0
        %1092 = vmatpush1.msra.mxu0 0.0
        %1093 = vmatprep.subr.mxu0 0.0
        %1094 = vmatpush1.msra.mxu0 0.0
        %1095 = vmatprep.subr.mxu0 0.0
        %1096 = vmatpush1.msra.mxu0 0.0
        %1097 = vmatprep.subr.mxu0 0.0
        %1098 = vmatpush1.msra.mxu0 0.0
        %1099 = vmatprep.subr.mxu0 0.0
        %1100 = vmatpush1.msra.mxu0 0.0
        %1101 = vmatprep.subr.mxu0 0.0
        %1102 = vmatpush1.msra.mxu0 0.0
        %1103 = vmatprep.subr.mxu0 0.0
        %1104 = vmatpush1.msra.mxu0 0.0
        %1105 = vmatprep.mubr.f32.mxu0 0.0
        %1106 = vmatmul.mubr.f32.gmra.mrb[0].mxu0 %v1037
        %v1107 = vpop.f32.mrb[0].mxu0
        %v1108 = vadd.f32 0.0, %v1107
        %v1109 = vpop.f32.mrb[0].mxu0
        %1110 = vmatprep.mubr.f32.mxu0 0.0
        %1111 = vmatmul.mubr.f32.gmra.mrb[0].mxu0 %v1039
        %v1112 = vpop.f32.mrb[0].mxu0
        %v1113 = vadd.f32 0.0, %v1112
        %v1114 = vpop.f32.mrb[0].mxu0
        %1115 = vdwg.mxu0
        %v1116 = vsel %vm1036, %v1011, 0
        %v1118 = vsel %vm1036, %v1012, 0
        %1120 = vmatprep.subr.mxu0 0.0
        %1121 = vmatpush1.msra.mxu0 %v1013
        %1122 = vmatprep.subr.mxu0 0.0
        %1123 = vmatpush1.msra.mxu0 %v1014
        %1124 = vmatprep.subr.mxu0 0.0
        %1125 = vmatpush1.msra.mxu0 %v1015
        %1126 = vmatprep.subr.mxu0 0.0
        %1127 = vmatpush1.msra.mxu0 %v1016
        %1128 = vmatprep.subr.mxu0 0.0
        %1129 = vmatpush1.msra.mxu0 %v1017
        %1130 = vmatprep.subr.mxu0 0.0
        %1131 = vmatpush1.msra.mxu0 %v1018
        %1132 = vmatprep.subr.mxu0 0.0
        %1133 = vmatpush1.msra.mxu0 %v1019
        %1134 = vmatprep.subr.mxu0 0.0
        %1135 = vmatpush1.msra.mxu0 %v1020
        %1136 = vmatprep.subr.mxu0 0.0
        %1137 = vmatpush1.msra.mxu0 0.0
        %1138 = vmatprep.subr.mxu0 0.0
        %1139 = vmatpush1.msra.mxu0 0.0
        %1140 = vmatprep.subr.mxu0 0.0
        %1141 = vmatpush1.msra.mxu0 0.0
        %1142 = vmatprep.subr.mxu0 0.0
        %1143 = vmatpush1.msra.mxu0 0.0
        %1144 = vmatprep.subr.mxu0 0.0
        %1145 = vmatpush1.msra.mxu0 0.0
        %1146 = vmatprep.subr.mxu0 0.0
        %1147 = vmatpush1.msra.mxu0 0.0
        %1148 = vmatprep.subr.mxu0 0.0
        %1149 = vmatpush1.msra.mxu0 0.0
        %1150 = vmatprep.subr.mxu0 0.0
        %1151 = vmatpush1.msra.mxu0 0.0
        %1152 = vmatprep.subr.mxu0 0.0
        %1153 = vmatpush1.msra.mxu0 0.0
        %1154 = vmatprep.subr.mxu0 0.0
        %1155 = vmatpush1.msra.mxu0 0.0
        %1156 = vmatprep.subr.mxu0 0.0
        %1157 = vmatpush1.msra.mxu0 0.0
        %1158 = vmatprep.subr.mxu0 0.0
        %1159 = vmatpush1.msra.mxu0 0.0
        %1160 = vmatprep.subr.mxu0 0.0
        %1161 = vmatpush1.msra.mxu0 0.0
        %1162 = vmatprep.subr.mxu0 0.0
        %1163 = vmatpush1.msra.mxu0 0.0
        %1164 = vmatprep.subr.mxu0 0.0
        %1165 = vmatpush1.msra.mxu0 0.0
        %1166 = vmatprep.subr.mxu0 0.0
        %1167 = vmatpush1.msra.mxu0 0.0
        %1168 = vmatprep.subr.mxu0 0.0
        %1169 = vmatpush1.msra.mxu0 0.0
        %1170 = vmatprep.subr.mxu0 0.0
        %1171 = vmatpush1.msra.mxu0 0.0
        %1172 = vmatprep.subr.mxu0 0.0
        %1173 = vmatpush1.msra.mxu0 0.0
        %1174 = vmatprep.subr.mxu0 0.0
        %1175 = vmatpush1.msra.mxu0 0.0
        %1176 = vmatprep.subr.mxu0 0.0
        %1177 = vmatpush1.msra.mxu0 0.0
        %1178 = vmatprep.subr.mxu0 0.0
        %1179 = vmatpush1.msra.mxu0 0.0
        %1180 = vmatprep.subr.mxu0 0.0
        %1181 = vmatpush1.msra.mxu0 0.0
        %1182 = vmatprep.subr.mxu0 0.0
        %1183 = vmatpush1.msra.mxu0 0.0
        %1184 = vmatprep.mubr.f32.mxu0 0.0
        %1185 = vmatmul.mubr.f32.gmra.mrb[0].mxu0 %v1116
        %v1186 = vpop.f32.mrb[0].mxu0
        %v1187 = vadd.f32 %v1108, %v1186
        %v1188 = vpop.f32.mrb[0].mxu0
        %1189 = vmatprep.mubr.f32.mxu0 0.0
        %1190 = vmatmul.mubr.f32.gmra.mrb[0].mxu0 %v1118
        %v1191 = vpop.f32.mrb[0].mxu0
        %v1192 = vadd.f32 %v1113, %v1191
        %v1193 = vpop.f32.mrb[0].mxu0
        %1194 = vdwg.mxu0
        %s1195 = scalar_lea.vmem %s5, 128
        %v1196 = vld [vmem:[%s1195] sm:$0xff]
        %v1197 = vld [vmem:[%s1195 + $0x8] sm:$0xff]
        %v1198 = vld [vmem:[%s1195 + $0x10] sm:$0xff]
        %v1199 = vld [vmem:[%s1195 + $0x18] sm:$0xff]
        %v1200 = vld [vmem:[%s1195 + $0x20] sm:$0xff]
        %v1201 = vld [vmem:[%s1195 + $0x28] sm:$0xff]
        %v1202 = vld [vmem:[%s1195 + $0x30] sm:$0xff]
        %v1203 = vld [vmem:[%s1195 + $0x38] sm:$0xff]
        %vm1204 = vcmask 1045504
        %v1205 = vrot.slane %v1011, 2
        %v1206 = vrot.slane %v1012, 2
        %v1207 = vsel %vm1204, %v1205, %v1206
        %v1208 = vsel %vm1036, %v1207, 0
        %v1210 = vsel %vm1036, %v1206, 0
        %1212 = vmatprep.subr.mxu0 0.0
        %1213 = vmatpush1.msra.mxu0 %v1196
        %1214 = vmatprep.subr.mxu0 0.0
        %1215 = vmatpush1.msra.mxu0 %v1197
        %1216 = vmatprep.subr.mxu0 0.0
        %1217 = vmatpush1.msra.mxu0 %v1198
        %1218 = vmatprep.subr.mxu0 0.0
        %1219 = vmatpush1.msra.mxu0 %v1199
        %1220 = vmatprep.subr.mxu0 0.0
        %1221 = vmatpush1.msra.mxu0 %v1200
        %1222 = vmatprep.subr.mxu0 0.0
        %1223 = vmatpush1.msra.mxu0 %v1201
        %1224 = vmatprep.subr.mxu0 0.0
        %1225 = vmatpush1.msra.mxu0 %v1202
        %1226 = vmatprep.subr.mxu0 0.0
        %1227 = vmatpush1.msra.mxu0 %v1203
        %1228 = vmatprep.subr.mxu0 0.0
        %1229 = vmatpush1.msra.mxu0 0.0
        %1230 = vmatprep.subr.mxu0 0.0
        %1231 = vmatpush1.msra.mxu0 0.0
        %1232 = vmatprep.subr.mxu0 0.0
        %1233 = vmatpush1.msra.mxu0 0.0
        %1234 = vmatprep.subr.mxu0 0.0
        %1235 = vmatpush1.msra.mxu0 0.0
        %1236 = vmatprep.subr.mxu0 0.0
        %1237 = vmatpush1.msra.mxu0 0.0
        %1238 = vmatprep.subr.mxu0 0.0
        %1239 = vmatpush1.msra.mxu0 0.0
        %1240 = vmatprep.subr.mxu0 0.0
        %1241 = vmatpush1.msra.mxu0 0.0
        %1242 = vmatprep.subr.mxu0 0.0
        %1243 = vmatpush1.msra.mxu0 0.0
        %1244 = vmatprep.subr.mxu0 0.0
        %1245 = vmatpush1.msra.mxu0 0.0
        %1246 = vmatprep.subr.mxu0 0.0
        %1247 = vmatpush1.msra.mxu0 0.0
        %1248 = vmatprep.subr.mxu0 0.0
        %1249 = vmatpush1.msra.mxu0 0.0
        %1250 = vmatprep.subr.mxu0 0.0
        %1251 = vmatpush1.msra.mxu0 0.0
        %1252 = vmatprep.subr.mxu0 0.0
        %1253 = vmatpush1.msra.mxu0 0.0
        %1254 = vmatprep.subr.mxu0 0.0
        %1255 = vmatpush1.msra.mxu0 0.0
        %1256 = vmatprep.subr.mxu0 0.0
        %1257 = vmatpush1.msra.mxu0 0.0
        %1258 = vmatprep.subr.mxu0 0.0
        %1259 = vmatpush1.msra.mxu0 0.0
        %1260 = vmatprep.subr.mxu0 0.0
        %1261 = vmatpush1.msra.mxu0 0.0
        %1262 = vmatprep.subr.mxu0 0.0
        %1263 = vmatpush1.msra.mxu0 0.0
        %1264 = vmatprep.subr.mxu0 0.0
        %1265 = vmatpush1.msra.mxu0 0.0
        %1266 = vmatprep.subr.mxu0 0.0
        %1267 = vmatpush1.msra.mxu0 0.0
        %1268 = vmatprep.subr.mxu0 0.0
        %1269 = vmatpush1.msra.mxu0 0.0
        %1270 = vmatprep.subr.mxu0 0.0
        %1271 = vmatpush1.msra.mxu0 0.0
        %1272 = vmatprep.subr.mxu0 0.0
        %1273 = vmatpush1.msra.mxu0 0.0
        %1274 = vmatprep.subr.mxu0 0.0
        %1275 = vmatpush1.msra.mxu0 0.0
        %1276 = vmatprep.mubr.f32.mxu0 0.0
        %1277 = vmatmul.mubr.f32.gmra.mrb[0].mxu0 %v1208
        %v1278 = vpop.f32.mrb[0].mxu0
        %v1279 = vadd.f32 0.0, %v1278
        %v1280 = vpop.f32.mrb[0].mxu0
        %1281 = vmatprep.mubr.f32.mxu0 0.0
        %1282 = vmatmul.mubr.f32.gmra.mrb[0].mxu0 %v1210
        %v1283 = vpop.f32.mrb[0].mxu0
        %v1284 = vadd.f32 0.0, %v1283
        %v1285 = vpop.f32.mrb[0].mxu0
        %1286 = vdwg.mxu0
        %v1287 = vadd.f32 %v1187, %v1279
        %v1288 = vadd.f32 %v1192, %v1284
        %v1289 = vld [vmem:[%s6] sm:$0x1]
        %v1291 = vlaneseq
        %v1292 = vshrl.u32 %v1291, 7
        %v1293 = vsub.s32 0, %v1292
        %v1294 = vrot.slane %v1289, %v1293
        %v1296 = vmul.f32 %v1287, %v1294
        %v1297 = vmul.f32 %v1288, %v1294
        %v1298 = vld [vmem:[%s7] sm:$0x1]
        %v1300 = vlaneseq
        %v1301 = vshrl.u32 %v1300, 7
        %v1302 = vsub.s32 0, %v1301
        %v1303 = vrot.slane %v1298, %v1302
        %v1305 = vadd.f32 %v1296, %v1303
        %v1306 = vadd.f32 %v1297, %v1303
        %v1307 = vmax.f32 %v1305, 0.0
        %v1308 = vmax.f32 %v1306, 0.0
        %v1309 = vld [vmem:[%s8] sm:$0x1f]
        %vm1310 = vcmask 97280
        %v1312 = vsel %vm1310, %v1309, 0
        %vm1314 = vcmask 1043456
        %v1316 = vsel %vm1314, %v1308, 0
        %1318 = vmatprep.subr.mxu0 0.0
        %1319 = vmatpush1.msra.mxu0 %v1307
        %1320 = vmatprep.subr.mxu0 0.0
        %1321 = vmatpush1.msra.mxu0 %v1316
        %1322 = vmatprep.subr.mxu0 0.0
        %1323 = vmatpush1.msra.mxu0 0.0
        %1324 = vmatprep.subr.mxu0 0.0
        %1325 = vmatpush1.msra.mxu0 0.0
        %1326 = vmatprep.subr.mxu0 0.0
        %1327 = vmatpush1.msra.mxu0 0.0
        %1328 = vmatprep.subr.mxu0 0.0
        %1329 = vmatpush1.msra.mxu0 0.0
        %1330 = vmatprep.subr.mxu0 0.0
        %1331 = vmatpush1.msra.mxu0 0.0
        %1332 = vmatprep.subr.mxu0 0.0
        %1333 = vmatpush1.msra.mxu0 0.0
        %1334 = vmatprep.subr.mxu0 0.0
        %1335 = vmatpush1.msra.mxu0 0.0
        %1336 = vmatprep.subr.mxu0 0.0
        %1337 = vmatpush1.msra.mxu0 0.0
        %1338 = vmatprep.subr.mxu0 0.0
        %1339 = vmatpush1.msra.mxu0 0.0
        %1340 = vmatprep.subr.mxu0 0.0
        %1341 = vmatpush1.msra.mxu0 0.0
        %1342 = vmatprep.subr.mxu0 0.0
        %1343 = vmatpush1.msra.mxu0 0.0
        %1344 = vmatprep.subr.mxu0 0.0
        %1345 = vmatpush1.msra.mxu0 0.0
        %1346 = vmatprep.subr.mxu0 0.0
        %1347 = vmatpush1.msra.mxu0 0.0
        %1348 = vmatprep.subr.mxu0 0.0
        %1349 = vmatpush1.msra.mxu0 0.0
        %1350 = vmatprep.subr.mxu0 0.0
        %1351 = vmatpush1.msra.mxu0 0.0
        %1352 = vmatprep.subr.mxu0 0.0
        %1353 = vmatpush1.msra.mxu0 0.0
        %1354 = vmatprep.subr.mxu0 0.0
        %1355 = vmatpush1.msra.mxu0 0.0
        %1356 = vmatprep.subr.mxu0 0.0
        %1357 = vmatpush1.msra.mxu0 0.0
        %1358 = vmatprep.subr.mxu0 0.0
        %1359 = vmatpush1.msra.mxu0 0.0
        %1360 = vmatprep.subr.mxu0 0.0
        %1361 = vmatpush1.msra.mxu0 0.0
        %1362 = vmatprep.subr.mxu0 0.0
        %1363 = vmatpush1.msra.mxu0 0.0
        %1364 = vmatprep.subr.mxu0 0.0
        %1365 = vmatpush1.msra.mxu0 0.0
        %1366 = vmatprep.subr.mxu0 0.0
        %1367 = vmatpush1.msra.mxu0 0.0
        %1368 = vmatprep.subr.mxu0 0.0
        %1369 = vmatpush1.msra.mxu0 0.0
        %1370 = vmatprep.subr.mxu0 0.0
        %1371 = vmatpush1.msra.mxu0 0.0
        %1372 = vmatprep.subr.mxu0 0.0
        %1373 = vmatpush1.msra.mxu0 0.0
        %1374 = vmatprep.subr.mxu0 0.0
        %1375 = vmatpush1.msra.mxu0 0.0
        %1376 = vmatprep.subr.mxu0 0.0
        %1377 = vmatpush1.msra.mxu0 0.0
        %1378 = vmatprep.subr.mxu0 0.0
        %1379 = vmatpush1.msra.mxu0 0.0
        %1380 = vmatprep.subr.mxu0 0.0
        %1381 = vmatpush1.msra.mxu0 0.0
        %1382 = vmatprep.mubr.f32.mxu0 0.0
        %1383 = vmatmul.mubr.f32.gmra.mrb[0].mxu0 %v1312
        %v1384 = vpop.f32.mrb[0].mxu0
        %v1385 = vadd.f32 0.0, %v1384
        %v1386 = vpop.f32.mrb[0].mxu0
        %1387 = vdwg.mxu0
        %s1388 = scalar_lea.vmem %s8, 8
        %v1389 = vld [vmem:[%s1388] sm:$0x1f]
        %v1391 = vsel %vm1310, %v1389, 0
        %1393 = vmatprep.subr.mxu0 0.0
        %1394 = vmatpush1.msra.mxu0 %v1307
        %1395 = vmatprep.subr.mxu0 0.0
        %1396 = vmatpush1.msra.mxu0 %v1316
        %1397 = vmatprep.subr.mxu0 0.0
        %1398 = vmatpush1.msra.mxu0 0.0
        %1399 = vmatprep.subr.mxu0 0.0
        %1400 = vmatpush1.msra.mxu0 0.0
        %1401 = vmatprep.subr.mxu0 0.0
        %1402 = vmatpush1.msra.mxu0 0.0
        %1403 = vmatprep.subr.mxu0 0.0
        %1404 = vmatpush1.msra.mxu0 0.0
        %1405 = vmatprep.subr.mxu0 0.0
        %1406 = vmatpush1.msra.mxu0 0.0
        %1407 = vmatprep.subr.mxu0 0.0
        %1408 = vmatpush1.msra.mxu0 0.0
        %1409 = vmatprep.subr.mxu0 0.0
        %1410 = vmatpush1.msra.mxu0 0.0
        %1411 = vmatprep.subr.mxu0 0.0
        %1412 = vmatpush1.msra.mxu0 0.0
        %1413 = vmatprep.subr.mxu0 0.0
        %1414 = vmatpush1.msra.mxu0 0.0
        %1415 = vmatprep.subr.mxu0 0.0
        %1416 = vmatpush1.msra.mxu0 0.0
        %1417 = vmatprep.subr.mxu0 0.0
        %1418 = vmatpush1.msra.mxu0 0.0
        %1419 = vmatprep.subr.mxu0 0.0
        %1420 = vmatpush1.msra.mxu0 0.0
        %1421 = vmatprep.subr.mxu0 0.0
        %1422 = vmatpush1.msra.mxu0 0.0
        %1423 = vmatprep.subr.mxu0 0.0
        %1424 = vmatpush1.msra.mxu0 0.0
        %1425 = vmatprep.subr.mxu0 0.0
        %1426 = vmatpush1.msra.mxu0 0.0
        %1427 = vmatprep.subr.mxu0 0.0
        %1428 = vmatpush1.msra.mxu0 0.0
        %1429 = vmatprep.subr.mxu0 0.0
        %1430 = vmatpush1.msra.mxu0 0.0
        %1431 = vmatprep.subr.mxu0 0.0
        %1432 = vmatpush1.msra.mxu0 0.0
        %1433 = vmatprep.subr.mxu0 0.0
        %1434 = vmatpush1.msra.mxu0 0.0
        %1435 = vmatprep.subr.mxu0 0.0
        %1436 = vmatpush1.msra.mxu0 0.0
        %1437 = vmatprep.subr.mxu0 0.0
        %1438 = vmatpush1.msra.mxu0 0.0
        %1439 = vmatprep.subr.mxu0 0.0
        %1440 = vmatpush1.msra.mxu0 0.0
        %1441 = vmatprep.subr.mxu0 0.0
        %1442 = vmatpush1.msra.mxu0 0.0
        %1443 = vmatprep.subr.mxu0 0.0
        %1444 = vmatpush1.msra.mxu0 0.0
        %1445 = vmatprep.subr.mxu0 0.0
        %1446 = vmatpush1.msra.mxu0 0.0
        %1447 = vmatprep.subr.mxu0 0.0
        %1448 = vmatpush1.msra.mxu0 0.0
        %1449 = vmatprep.subr.mxu0 0.0
        %1450 = vmatpush1.msra.mxu0 0.0
        %1451 = vmatprep.subr.mxu0 0.0
        %1452 = vmatpush1.msra.mxu0 0.0
        %1453 = vmatprep.subr.mxu0 0.0
        %1454 = vmatpush1.msra.mxu0 0.0
        %1455 = vmatprep.subr.mxu0 0.0
        %1456 = vmatpush1.msra.mxu0 0.0
        %1457 = vmatprep.mubr.f32.mxu0 0.0
        %1458 = vmatmul.mubr.f32.gmra.mrb[0].mxu0 %v1391
        %v1459 = vpop.f32.mrb[0].mxu0
        %v1460 = vadd.f32 0.0, %v1459
        %v1461 = vpop.f32.mrb[0].mxu0
        %1462 = vdwg.mxu0
        %v1463 = vmax.f32 %v1385, %v1460
        %s1464 = scalar_lea.vmem %s8, 16
        %v1465 = vld [vmem:[%s1464] sm:$0x1f]
        %v1467 = vsel %vm1310, %v1465, 0
        %1469 = vmatprep.subr.mxu0 0.0
        %1470 = vmatpush1.msra.mxu0 %v1307
        %1471 = vmatprep.subr.mxu0 0.0
        %1472 = vmatpush1.msra.mxu0 %v1316
        %1473 = vmatprep.subr.mxu0 0.0
        %1474 = vmatpush1.msra.mxu0 0.0
        %1475 = vmatprep.subr.mxu0 0.0
        %1476 = vmatpush1.msra.mxu0 0.0
        %1477 = vmatprep.subr.mxu0 0.0
        %1478 = vmatpush1.msra.mxu0 0.0
        %1479 = vmatprep.subr.mxu0 0.0
        %1480 = vmatpush1.msra.mxu0 0.0
        %1481 = vmatprep.subr.mxu0 0.0
        %1482 = vmatpush1.msra.mxu0 0.0
        %1483 = vmatprep.subr.mxu0 0.0
        %1484 = vmatpush1.msra.mxu0 0.0
        %1485 = vmatprep.subr.mxu0 0.0
        %1486 = vmatpush1.msra.mxu0 0.0
        %1487 = vmatprep.subr.mxu0 0.0
        %1488 = vmatpush1.msra.mxu0 0.0
        %1489 = vmatprep.subr.mxu0 0.0
        %1490 = vmatpush1.msra.mxu0 0.0
        %1491 = vmatprep.subr.mxu0 0.0
        %1492 = vmatpush1.msra.mxu0 0.0
        %1493 = vmatprep.subr.mxu0 0.0
        %1494 = vmatpush1.msra.mxu0 0.0
        %1495 = vmatprep.subr.mxu0 0.0
        %1496 = vmatpush1.msra.mxu0 0.0
        %1497 = vmatprep.subr.mxu0 0.0
        %1498 = vmatpush1.msra.mxu0 0.0
        %1499 = vmatprep.subr.mxu0 0.0
        %1500 = vmatpush1.msra.mxu0 0.0
        %1501 = vmatprep.subr.mxu0 0.0
        %1502 = vmatpush1.msra.mxu0 0.0
        %1503 = vmatprep.subr.mxu0 0.0
        %1504 = vmatpush1.msra.mxu0 0.0
        %1505 = vmatprep.subr.mxu0 0.0
        %1506 = vmatpush1.msra.mxu0 0.0
        %1507 = vmatprep.subr.mxu0 0.0
        %1508 = vmatpush1.msra.mxu0 0.0
        %1509 = vmatprep.subr.mxu0 0.0
        %1510 = vmatpush1.msra.mxu0 0.0
        %1511 = vmatprep.subr.mxu0 0.0
        %1512 = vmatpush1.msra.mxu0 0.0
        %1513 = vmatprep.subr.mxu0 0.0
        %1514 = vmatpush1.msra.mxu0 0.0
        %1515 = vmatprep.subr.mxu0 0.0
        %1516 = vmatpush1.msra.mxu0 0.0
        %1517 = vmatprep.subr.mxu0 0.0
        %1518 = vmatpush1.msra.mxu0 0.0
        %1519 = vmatprep.subr.mxu0 0.0
        %1520 = vmatpush1.msra.mxu0 0.0
        %1521 = vmatprep.subr.mxu0 0.0
        %1522 = vmatpush1.msra.mxu0 0.0
        %1523 = vmatprep.subr.mxu0 0.0
        %1524 = vmatpush1.msra.mxu0 0.0
        %1525 = vmatprep.subr.mxu0 0.0
        %1526 = vmatpush1.msra.mxu0 0.0
        %1527 = vmatprep.subr.mxu0 0.0
        %1528 = vmatpush1.msra.mxu0 0.0
        %1529 = vmatprep.subr.mxu0 0.0
        %1530 = vmatpush1.msra.mxu0 0.0
        %1531 = vmatprep.subr.mxu0 0.0
        %1532 = vmatpush1.msra.mxu0 0.0
        %1533 = vmatprep.mubr.f32.mxu0 0.0
        %1534 = vmatmul.mubr.f32.gmra.mrb[0].mxu0 %v1467
        %v1535 = vpop.f32.mrb[0].mxu0
        %v1536 = vadd.f32 0.0, %v1535
        %v1537 = vpop.f32.mrb[0].mxu0
        %1538 = vdwg.mxu0
        %v1539 = vmax.f32 %v1463, %v1536
        %v1540 = vld [vmem:[%s9] sm:$0xff]
        %v1541 = vld [vmem:[%s9 + $0x8] sm:$0xff]
        %v1542 = vld [vmem:[%s9 + $0x10] sm:$0xff]
        %v1543 = vld [vmem:[%s9 + $0x18] sm:$0xff]
        %v1544 = vld [vmem:[%s9 + $0x20] sm:$0xff]
        %v1545 = vld [vmem:[%s9 + $0x28] sm:$0xff]
        %v1546 = vld [vmem:[%s9 + $0x30] sm:$0xff]
        %v1547 = vld [vmem:[%s9 + $0x38] sm:$0xff]
        %v1548 = vld [vmem:[%s9 + $0x40] sm:$0xff]
        %v1549 = vld [vmem:[%s9 + $0x48] sm:$0xff]
        %v1550 = vld [vmem:[%s9 + $0x50] sm:$0xff]
        %v1551 = vld [vmem:[%s9 + $0x58] sm:$0xff]
        %v1552 = vld [vmem:[%s9 + $0x60] sm:$0xff]
        %v1553 = vld [vmem:[%s9 + $0x68] sm:$0xff]
        %v1554 = vld [vmem:[%s9 + $0x70] sm:$0xff]
        %v1555 = vld [vmem:[%s9 + $0x78] sm:$0xff]
        %v1556 = vld [vmem:[%s10] sm:$0x1]
        %v1558 = vlaneseq
        %v1559 = vshrl.u32 %v1558, 7
        %v1560 = vsub.s32 0, %v1559
        %v1561 = vrot.slane %v1556, %v1560
        %1563 = vmatprep.subr.mxu0 0.0
        %1564 = vmatpush1.msra.mxu0 %v1540
        %1565 = vmatprep.subr.mxu0 0.0
        %1566 = vmatpush1.msra.mxu0 %v1541
        %1567 = vmatprep.subr.mxu0 0.0
        %1568 = vmatpush1.msra.mxu0 %v1542
        %1569 = vmatprep.subr.mxu0 0.0
        %1570 = vmatpush1.msra.mxu0 %v1543
        %1571 = vmatprep.subr.mxu0 0.0
        %1572 = vmatpush1.msra.mxu0 %v1544
        %1573 = vmatprep.subr.mxu0 0.0
        %1574 = vmatpush1.msra.mxu0 %v1545
        %1575 = vmatprep.subr.mxu0 0.0
        %1576 = vmatpush1.msra.mxu0 %v1546
        %1577 = vmatprep.subr.mxu0 0.0
        %1578 = vmatpush1.msra.mxu0 %v1547
        %1579 = vmatprep.subr.mxu0 0.0
        %1580 = vmatpush1.msra.mxu0 %v1548
        %1581 = vmatprep.subr.mxu0 0.0
        %1582 = vmatpush1.msra.mxu0 %v1549
        %1583 = vmatprep.subr.mxu0 0.0
        %1584 = vmatpush1.msra.mxu0 %v1550
        %1585 = vmatprep.subr.mxu0 0.0
        %1586 = vmatpush1.msra.mxu0 %v1551
        %1587 = vmatprep.subr.mxu0 0.0
        %1588 = vmatpush1.msra.mxu0 %v1552
        %1589 = vmatprep.subr.mxu0 0.0
        %1590 = vmatpush1.msra.mxu0 %v1553
        %1591 = vmatprep.subr.mxu0 0.0
        %1592 = vmatpush1.msra.mxu0 %v1554
        %1593 = vmatprep.subr.mxu0 0.0
        %1594 = vmatpush1.msra.mxu0 %v1555
        %1595 = vmatprep.subr.mxu0 0.0
        %1596 = vmatpush1.msra.mxu0 0.0
        %1597 = vmatprep.subr.mxu0 0.0
        %1598 = vmatpush1.msra.mxu0 0.0
        %1599 = vmatprep.subr.mxu0 0.0
        %1600 = vmatpush1.msra.mxu0 0.0
        %1601 = vmatprep.subr.mxu0 0.0
        %1602 = vmatpush1.msra.mxu0 0.0
        %1603 = vmatprep.subr.mxu0 0.0
        %1604 = vmatpush1.msra.mxu0 0.0
        %1605 = vmatprep.subr.mxu0 0.0
        %1606 = vmatpush1.msra.mxu0 0.0
        %1607 = vmatprep.subr.mxu0 0.0
        %1608 = vmatpush1.msra.mxu0 0.0
        %1609 = vmatprep.subr.mxu0 0.0
        %1610 = vmatpush1.msra.mxu0 0.0
        %1611 = vmatprep.subr.mxu0 0.0
        %1612 = vmatpush1.msra.mxu0 0.0
        %1613 = vmatprep.subr.mxu0 0.0
        %1614 = vmatpush1.msra.mxu0 0.0
        %1615 = vmatprep.subr.mxu0 0.0
        %1616 = vmatpush1.msra.mxu0 0.0
        %1617 = vmatprep.subr.mxu0 0.0
        %1618 = vmatpush1.msra.mxu0 0.0
        %1619 = vmatprep.subr.mxu0 0.0
        %1620 = vmatpush1.msra.mxu0 0.0
        %1621 = vmatprep.subr.mxu0 0.0
        %1622 = vmatpush1.msra.mxu0 0.0
        %1623 = vmatprep.subr.mxu0 0.0
        %1624 = vmatpush1.msra.mxu0 0.0
        %1625 = vmatprep.subr.mxu0 0.0
        %1626 = vmatpush1.msra.mxu0 0.0
        %1627 = vmatprep.mubr.f32.mxu0 0.0
        %1628 = vmatmul.mubr.f32.gmra.mrb[0].mxu0 %v1539
        %v1629 = vpop.f32.mrb[0].mxu0
        %v1630 = vadd.f32 %v1561, %v1629
        %v1631 = vpop.f32.mrb[0].mxu0
        %1632 = vdwg.mxu0
        %1634 = vrot.lane.b32.xlu0 %v1630, 96
        %v1635 = vpop.permute.xlu0 %1634
        %1636 = vrot.lane.b32.xlu0 %v1630, 64
        %v1637 = vpop.permute.xlu0 %1636
        %vm1638 = vcmask 261120
        %v1639 = vsel %vm1638, %v1635, 0
        %v1641 = vsel %vm1638, %v1637, 0
        %1643 = vmatprep.subr.mxu0 0.0
        %1644 = vmatpush1.xpose.msra.mxu0 %v1641
        %1645 = vmatprep.subr.mxu0 0.0
        %1646 = vmatpush1.xpose.msra.mxu0 0.0
        %1647 = vmatprep.subr.mxu0 0.0
        %1648 = vmatpush1.xpose.msra.mxu0 0.0
        %1649 = vmatprep.subr.mxu0 0.0
        %1650 = vmatpush1.xpose.msra.mxu0 0.0
        %1651 = vmatprep.subr.mxu0 0.0
        %1652 = vmatpush1.xpose.msra.mxu0 0.0
        %1653 = vmatprep.subr.mxu0 0.0
        %1654 = vmatpush1.xpose.msra.mxu0 0.0
        %1655 = vmatprep.subr.mxu0 0.0
        %1656 = vmatpush1.xpose.msra.mxu0 0.0
        %1657 = vmatprep.subr.mxu0 0.0
        %1658 = vmatpush1.xpose.msra.mxu0 0.0
        %1659 = vmatprep.subr.mxu0 0.0
        %1660 = vmatpush1.xpose.msra.mxu0 0.0
        %1661 = vmatprep.subr.mxu0 0.0
        %1662 = vmatpush1.xpose.msra.mxu0 0.0
        %1663 = vmatprep.subr.mxu0 0.0
        %1664 = vmatpush1.xpose.msra.mxu0 0.0
        %1665 = vmatprep.subr.mxu0 0.0
        %1666 = vmatpush1.xpose.msra.mxu0 0.0
        %1667 = vmatprep.subr.mxu0 0.0
        %1668 = vmatpush1.xpose.msra.mxu0 0.0
        %1669 = vmatprep.subr.mxu0 0.0
        %1670 = vmatpush1.xpose.msra.mxu0 0.0
        %1671 = vmatprep.subr.mxu0 0.0
        %1672 = vmatpush1.xpose.msra.mxu0 0.0
        %1673 = vmatprep.subr.mxu0 0.0
        %1674 = vmatpush1.xpose.msra.mxu0 0.0
        %1675 = vmatprep.subr.mxu0 0.0
        %1676 = vmatpush1.xpose.msra.mxu0 0.0
        %1677 = vmatprep.subr.mxu0 0.0
        %1678 = vmatpush1.xpose.msra.mxu0 0.0
        %1679 = vmatprep.subr.mxu0 0.0
        %1680 = vmatpush1.xpose.msra.mxu0 0.0
        %1681 = vmatprep.subr.mxu0 0.0
        %1682 = vmatpush1.xpose.msra.mxu0 0.0
        %1683 = vmatprep.subr.mxu0 0.0
        %1684 = vmatpush1.xpose.msra.mxu0 0.0
        %1685 = vmatprep.subr.mxu0 0.0
        %1686 = vmatpush1.xpose.msra.mxu0 0.0
        %1687 = vmatprep.subr.mxu0 0.0
        %1688 = vmatpush1.xpose.msra.mxu0 0.0
        %1689 = vmatprep.subr.mxu0 0.0
        %1690 = vmatpush1.xpose.msra.mxu0 0.0
        %1691 = vmatprep.subr.mxu0 0.0
        %1692 = vmatpush1.xpose.msra.mxu0 0.0
        %1693 = vmatprep.subr.mxu0 0.0
        %1694 = vmatpush1.xpose.msra.mxu0 0.0
        %1695 = vmatprep.subr.mxu0 0.0
        %1696 = vmatpush1.xpose.msra.mxu0 0.0
        %1697 = vmatprep.subr.mxu0 0.0
        %1698 = vmatpush1.xpose.msra.mxu0 0.0
        %1699 = vmatprep.subr.mxu0 0.0
        %1700 = vmatpush1.xpose.msra.mxu0 0.0
        %1701 = vmatprep.subr.mxu0 0.0
        %1702 = vmatpush1.xpose.msra.mxu0 0.0
        %1703 = vmatprep.subr.mxu0 0.0
        %1704 = vmatpush1.xpose.msra.mxu0 0.0
        %1705 = vmatprep.subr.mxu0 0.0
        %1706 = vmatpush1.xpose.msra.mxu0 0.0
        %1707 = vmatprep.mubr.f32.mxu0 0.0
        %1708 = vmatmul.mubr.f32.gmra.mrb[0].mxu0 %v1639
        %v1709 = vpop.f32.mrb[0].mxu0
        %v1710 = vadd.f32 0.0, %v1709
        %v1711 = vpop.f32.mrb[0].mxu0
        %1712 = vdwg.mxu0
        %vm1713 = vcmask 36864
        %v1714 = vsel %vm1713, %v1710, -inf
        %1715 = vmax.xlane.f32.xlu0 %v1714
        %v1716 = vpop.xlane.xlu0 %1715
        %v1717 = vsub.f32 %v1710, %v1716
        %v1718 = vmul.f32 %v1717, 1.442695
        %v1719 = vpow.pop %v1718
        %v1720 = vsel %vm1713, %v1719, 0.0
        %1721 = vadd.xlane.f32.xlu0 %v1720
        %v1722 = vpop.xlane.xlu0 %1721
        %v1723 = vrcp.pop %v1722
        %v1724 = vmul.f32 %v1719, %v1723
        %vm1725 = vcmask 39936
        %v1727 = vsel %vm1725, %v1724, 0
        %v1729 = vsel %vm762, %v1630, 0
        %1731 = vmatprep.subr.mxu0 0.0
        %1732 = vmatpush1.msra.mxu0 %v1729
        %1733 = vmatprep.subr.mxu0 0.0
        %1734 = vmatpush1.msra.mxu0 0.0
        %1735 = vmatprep.subr.mxu0 0.0
        %1736 = vmatpush1.msra.mxu0 0.0
        %1737 = vmatprep.subr.mxu0 0.0
        %1738 = vmatpush1.msra.mxu0 0.0
        %1739 = vmatprep.subr.mxu0 0.0
        %1740 = vmatpush1.msra.mxu0 0.0
        %1741 = vmatprep.subr.mxu0 0.0
        %1742 = vmatpush1.msra.mxu0 0.0
        %1743 = vmatprep.subr.mxu0 0.0
        %1744 = vmatpush1.msra.mxu0 0.0
        %1745 = vmatprep.subr.mxu0 0.0
        %1746 = vmatpush1.msra.mxu0 0.0
        %1747 = vmatprep.subr.mxu0 0.0
        %1748 = vmatpush1.msra.mxu0 0.0
        %1749 = vmatprep.subr.mxu0 0.0
        %1750 = vmatpush1.msra.mxu0 0.0
        %1751 = vmatprep.subr.mxu0 0.0
        %1752 = vmatpush1.msra.mxu0 0.0
        %1753 = vmatprep.subr.mxu0 0.0
        %1754 = vmatpush1.msra.mxu0 0.0
        %1755 = vmatprep.subr.mxu0 0.0
        %1756 = vmatpush1.msra.mxu0 0.0
        %1757 = vmatprep.subr.mxu0 0.0
        %1758 = vmatpush1.msra.mxu0 0.0
        %1759 = vmatprep.subr.mxu0 0.0
        %1760 = vmatpush1.msra.mxu0 0.0
        %1761 = vmatprep.subr.mxu0 0.0
        %1762 = vmatpush1.msra.mxu0 0.0
        %1763 = vmatprep.subr.mxu0 0.0
        %1764 = vmatpush1.msra.mxu0 0.0
        %1765 = vmatprep.subr.mxu0 0.0
        %1766 = vmatpush1.msra.mxu0 0.0
        %1767 = vmatprep.subr.mxu0 0.0
        %1768 = vmatpush1.msra.mxu0 0.0
        %1769 = vmatprep.subr.mxu0 0.0
        %1770 = vmatpush1.msra.mxu0 0.0
        %1771 = vmatprep.subr.mxu0 0.0
        %1772 = vmatpush1.msra.mxu0 0.0
        %1773 = vmatprep.subr.mxu0 0.0
        %1774 = vmatpush1.msra.mxu0 0.0
        %1775 = vmatprep.subr.mxu0 0.0
        %1776 = vmatpush1.msra.mxu0 0.0
        %1777 = vmatprep.subr.mxu0 0.0
        %1778 = vmatpush1.msra.mxu0 0.0
        %1779 = vmatprep.subr.mxu0 0.0
        %1780 = vmatpush1.msra.mxu0 0.0
        %1781 = vmatprep.subr.mxu0 0.0
        %1782 = vmatpush1.msra.mxu0 0.0
        %1783 = vmatprep.subr.mxu0 0.0
        %1784 = vmatpush1.msra.mxu0 0.0
        %1785 = vmatprep.subr.mxu0 0.0
        %1786 = vmatpush1.msra.mxu0 0.0
        %1787 = vmatprep.subr.mxu0 0.0
        %1788 = vmatpush1.msra.mxu0 0.0
        %1789 = vmatprep.subr.mxu0 0.0
        %1790 = vmatpush1.msra.mxu0 0.0
        %1791 = vmatprep.subr.mxu0 0.0
        %1792 = vmatpush1.msra.mxu0 0.0
        %1793 = vmatprep.subr.mxu0 0.0
        %1794 = vmatpush1.msra.mxu0 0.0
        %1795 = vmatprep.mubr.f32.mxu0 0.0
        %1796 = vmatmul.mubr.f32.gmra.mrb[0].mxu0 %v1727
        %v1797 = vpop.f32.mrb[0].mxu0
        %v1798 = vadd.f32 0.0, %v1797
        %v1799 = vpop.f32.mrb[0].mxu0
        %1800 = vdwg.mxu0
        %v1801 = vld [vmem:[%s11] sm:$0xff]
        %v1802 = vld [vmem:[%s11 + $0x8] sm:$0xff]
        %v1803 = vld [vmem:[%s11 + $0x10] sm:$0xff]
        %v1804 = vld [vmem:[%s11 + $0x18] sm:$0xff]
        %v1806 = vsel %vm1638, %v1798, 0
        %1808 = vmatprep.subr.mxu0 0.0
        %1809 = vmatpush1.msra.mxu0 %v1801
        %1810 = vmatprep.subr.mxu0 0.0
        %1811 = vmatpush1.msra.mxu0 %v1802
        %1812 = vmatprep.subr.mxu0 0.0
        %1813 = vmatpush1.msra.mxu0 %v1803
        %1814 = vmatprep.subr.mxu0 0.0
        %1815 = vmatpush1.msra.mxu0 %v1804
        %1816 = vmatprep.subr.mxu0 0.0
        %1817 = vmatpush1.msra.mxu0 0.0
        %1818 = vmatprep.subr.mxu0 0.0
        %1819 = vmatpush1.msra.mxu0 0.0
        %1820 = vmatprep.subr.mxu0 0.0
        %1821 = vmatpush1.msra.mxu0 0.0
        %1822 = vmatprep.subr.mxu0 0.0
        %1823 = vmatpush1.msra.mxu0 0.0
        %1824 = vmatprep.subr.mxu0 0.0
        %1825 = vmatpush1.msra.mxu0 0.0
        %1826 = vmatprep.subr.mxu0 0.0
        %1827 = vmatpush1.msra.mxu0 0.0
        %1828 = vmatprep.subr.mxu0 0.0
        %1829 = vmatpush1.msra.mxu0 0.0
        %1830 = vmatprep.subr.mxu0 0.0
        %1831 = vmatpush1.msra.mxu0 0.0
        %1832 = vmatprep.subr.mxu0 0.0
        %1833 = vmatpush1.msra.mxu0 0.0
        %1834 = vmatprep.subr.mxu0 0.0
        %1835 = vmatpush1.msra.mxu0 0.0
        %1836 = vmatprep.subr.mxu0 0.0
        %1837 = vmatpush1.msra.mxu0 0.0
        %1838 = vmatprep.subr.mxu0 0.0
        %1839 = vmatpush1.msra.mxu0 0.0
        %1840 = vmatprep.subr.mxu0 0.0
        %1841 = vmatpush1.msra.mxu0 0.0
        %1842 = vmatprep.subr.mxu0 0.0
        %1843 = vmatpush1.msra.mxu0 0.0
        %1844 = vmatprep.subr.mxu0 0.0
        %1845 = vmatpush1.msra.mxu0 0.0
        %1846 = vmatprep.subr.mxu0 0.0
        %1847 = vmatpush1.msra.mxu0 0.0
        %1848 = vmatprep.subr.mxu0 0.0
        %1849 = vmatpush1.msra.mxu0 0.0
        %1850 = vmatprep.subr.mxu0 0.0
        %1851 = vmatpush1.msra.mxu0 0.0
        %1852 = vmatprep.subr.mxu0 0.0
        %1853 = vmatpush1.msra.mxu0 0.0
        %1854 = vmatprep.subr.mxu0 0.0
        %1855 = vmatpush1.msra.mxu0 0.0
        %1856 = vmatprep.subr.mxu0 0.0
        %1857 = vmatpush1.msra.mxu0 0.0
        %1858 = vmatprep.subr.mxu0 0.0
        %1859 = vmatpush1.msra.mxu0 0.0
        %1860 = vmatprep.subr.mxu0 0.0
        %1861 = vmatpush1.msra.mxu0 0.0
        %1862 = vmatprep.subr.mxu0 0.0
        %1863 = vmatpush1.msra.mxu0 0.0
        %1864 = vmatprep.subr.mxu0 0.0
        %1865 = vmatpush1.msra.mxu0 0.0
        %1866 = vmatprep.subr.mxu0 0.0
        %1867 = vmatpush1.msra.mxu0 0.0
        %1868 = vmatprep.subr.mxu0 0.0
        %1869 = vmatpush1.msra.mxu0 0.0
        %1870 = vmatprep.subr.mxu0 0.0
        %1871 = vmatpush1.msra.mxu0 0.0
        %1872 = vmatprep.mubr.f32.mxu0 0.0
        %1873 = vmatmul.mubr.f32.gmra.mrb[0].mxu0 %v1806
        %v1874 = vpop.f32.mrb[0].mxu0
        %v1875 = vadd.f32 0.0, %v1874
        %v1876 = vpop.f32.mrb[0].mxu0
        %1877 = vdwg.mxu0
        %v1878 = vld [vmem:[%s12] sm:$0x1]
        %v1880 = vlaneseq
        %v1881 = vshrl.u32 %v1880, 7
        %v1882 = vsub.s32 0, %v1881
        %v1883 = vrot.slane %v1878, %v1882
        %v1885 = vmul.f32 %v1875, %v1883
        %v1886 = vld [vmem:[%s13] sm:$0x1]
        %v1888 = vlaneseq
        %v1889 = vshrl.u32 %v1888, 7
        %v1890 = vsub.s32 0, %v1889
        %v1891 = vrot.slane %v1886, %v1890
        %v1893 = vadd.f32 %v1885, %v1891
        %v1894 = vadd.f32 %v1893, %v1539
        %v1895 = vld [vmem:[%s14] sm:$0xff]
        %v1896 = vld [vmem:[%s14 + $0x8] sm:$0xff]
        %v1897 = vld [vmem:[%s14 + $0x10] sm:$0xff]
        %v1898 = vld [vmem:[%s14 + $0x18] sm:$0xff]
        %v1899 = vld [vmem:[%s14 + $0x20] sm:$0xff]
        %v1900 = vld [vmem:[%s14 + $0x28] sm:$0xff]
        %v1901 = vld [vmem:[%s14 + $0x30] sm:$0xff]
        %v1902 = vld [vmem:[%s14 + $0x38] sm:$0xff]
        %v1903 = vld [vmem:[%s14 + $0x40] sm:$0xff]
        %v1904 = vld [vmem:[%s14 + $0x48] sm:$0xff]
        %v1905 = vld [vmem:[%s14 + $0x50] sm:$0xff]
        %v1906 = vld [vmem:[%s14 + $0x58] sm:$0xff]
        %v1907 = vld [vmem:[%s14 + $0x60] sm:$0xff]
        %v1908 = vld [vmem:[%s14 + $0x68] sm:$0xff]
        %v1909 = vld [vmem:[%s14 + $0x70] sm:$0xff]
        %v1910 = vld [vmem:[%s14 + $0x78] sm:$0xff]
        %v1911 = vld [vmem:[%s14 + $0x80] sm:$0xff]
        %v1912 = vld [vmem:[%s14 + $0x88] sm:$0xff]
        %v1913 = vld [vmem:[%s14 + $0x90] sm:$0xff]
        %v1914 = vld [vmem:[%s14 + $0x98] sm:$0xff]
        %v1915 = vld [vmem:[%s14 + $0xa0] sm:$0xff]
        %v1916 = vld [vmem:[%s14 + $0xa8] sm:$0xff]
        %v1917 = vld [vmem:[%s14 + $0xb0] sm:$0xff]
        %v1918 = vld [vmem:[%s14 + $0xb8] sm:$0xff]
        %v1919 = vld [vmem:[%s14 + $0xc0] sm:$0xff]
        %v1920 = vld [vmem:[%s14 + $0xc8] sm:$0xff]
        %v1921 = vld [vmem:[%s14 + $0xd0] sm:$0xff]
        %v1922 = vld [vmem:[%s14 + $0xd8] sm:$0xff]
        %v1923 = vld [vmem:[%s14 + $0xe0] sm:$0xff]
        %v1924 = vld [vmem:[%s14 + $0xe8] sm:$0xff]
        %v1925 = vld [vmem:[%s14 + $0xf0] sm:$0xff]
        %v1926 = vld [vmem:[%s14 + $0xf8] sm:$0xff]
        %s1927 = scalar_lea.vmem %s14, 256
        %v1928 = vld [vmem:[%s1927] sm:$0xff]
        %v1929 = vld [vmem:[%s1927 + $0x8] sm:$0xff]
        %v1930 = vld [vmem:[%s1927 + $0x10] sm:$0xff]
        %v1931 = vld [vmem:[%s1927 + $0x18] sm:$0xff]
        %v1932 = vld [vmem:[%s1927 + $0x20] sm:$0xff]
        %v1933 = vld [vmem:[%s1927 + $0x28] sm:$0xff]
        %v1934 = vld [vmem:[%s1927 + $0x30] sm:$0xff]
        %v1935 = vld [vmem:[%s1927 + $0x38] sm:$0xff]
        %v1936 = vld [vmem:[%s1927 + $0x40] sm:$0xff]
        %v1937 = vld [vmem:[%s1927 + $0x48] sm:$0xff]
        %v1938 = vld [vmem:[%s1927 + $0x50] sm:$0xff]
        %v1939 = vld [vmem:[%s1927 + $0x58] sm:$0xff]
        %v1940 = vld [vmem:[%s1927 + $0x60] sm:$0xff]
        %v1941 = vld [vmem:[%s1927 + $0x68] sm:$0xff]
        %v1942 = vld [vmem:[%s1927 + $0x70] sm:$0xff]
        %v1943 = vld [vmem:[%s1927 + $0x78] sm:$0xff]
        %v1944 = vld [vmem:[%s1927 + $0x80] sm:$0xff]
        %v1945 = vld [vmem:[%s1927 + $0x88] sm:$0xff]
        %v1946 = vld [vmem:[%s1927 + $0x90] sm:$0xff]
        %v1947 = vld [vmem:[%s1927 + $0x98] sm:$0xff]
        %v1948 = vld [vmem:[%s1927 + $0xa0] sm:$0xff]
        %v1949 = vld [vmem:[%s1927 + $0xa8] sm:$0xff]
        %v1950 = vld [vmem:[%s1927 + $0xb0] sm:$0xff]
        %v1951 = vld [vmem:[%s1927 + $0xb8] sm:$0xff]
        %v1952 = vld [vmem:[%s1927 + $0xc0] sm:$0xff]
        %v1953 = vld [vmem:[%s1927 + $0xc8] sm:$0xff]
        %v1954 = vld [vmem:[%s1927 + $0xd0] sm:$0xff]
        %v1955 = vld [vmem:[%s1927 + $0xd8] sm:$0xff]
        %v1956 = vld [vmem:[%s1927 + $0xe0] sm:$0xff]
        %v1957 = vld [vmem:[%s1927 + $0xe8] sm:$0xff]
        %v1958 = vld [vmem:[%s1927 + $0xf0] sm:$0xff]
        %v1959 = vld [vmem:[%s1927 + $0xf8] sm:$0xff]
        %v1961 = vrot.slane %v1894, 1
        %1963 = vmatprep.subr.mxu0 %v1929
        %1964 = vmatpush1.msra.mxu0 %v1928
        %1965 = vmatprep.subr.mxu0 %v1931
        %1966 = vmatpush1.msra.mxu0 %v1930
        %1967 = vmatprep.subr.mxu0 %v1933
        %1968 = vmatpush1.msra.mxu0 %v1932
        %1969 = vmatprep.subr.mxu0 %v1935
        %1970 = vmatpush1.msra.mxu0 %v1934
        %1971 = vmatprep.subr.mxu0 %v1937
        %1972 = vmatpush1.msra.mxu0 %v1936
        %1973 = vmatprep.subr.mxu0 %v1939
        %1974 = vmatpush1.msra.mxu0 %v1938
        %1975 = vmatprep.subr.mxu0 %v1941
        %1976 = vmatpush1.msra.mxu0 %v1940
        %1977 = vmatprep.subr.mxu0 %v1943
        %1978 = vmatpush1.msra.mxu0 %v1942
        %1979 = vmatprep.subr.mxu0 %v1945
        %1980 = vmatpush1.msra.mxu0 %v1944
        %1981 = vmatprep.subr.mxu0 %v1947
        %1982 = vmatpush1.msra.mxu0 %v1946
        %1983 = vmatprep.subr.mxu0 %v1949
        %1984 = vmatpush1.msra.mxu0 %v1948
        %1985 = vmatprep.subr.mxu0 %v1951
        %1986 = vmatpush1.msra.mxu0 %v1950
        %1987 = vmatprep.subr.mxu0 %v1953
        %1988 = vmatpush1.msra.mxu0 %v1952
        %1989 = vmatprep.subr.mxu0 %v1955
        %1990 = vmatpush1.msra.mxu0 %v1954
        %1991 = vmatprep.subr.mxu0 %v1957
        %1992 = vmatpush1.msra.mxu0 %v1956
        %1993 = vmatprep.subr.mxu0 %v1959
        %1994 = vmatpush1.msra.mxu0 %v1958
        %1995 = vmatprep.subr.mxu0 0.0
        %1996 = vmatpush1.msra.mxu0 0.0
        %1997 = vmatprep.subr.mxu0 0.0
        %1998 = vmatpush1.msra.mxu0 0.0
        %1999 = vmatprep.subr.mxu0 0.0
        %2000 = vmatpush1.msra.mxu0 0.0
        %2001 = vmatprep.subr.mxu0 0.0
        %2002 = vmatpush1.msra.mxu0 0.0
        %2003 = vmatprep.subr.mxu0 0.0
        %2004 = vmatpush1.msra.mxu0 0.0
        %2005 = vmatprep.subr.mxu0 0.0
        %2006 = vmatpush1.msra.mxu0 0.0
        %2007 = vmatprep.subr.mxu0 0.0
        %2008 = vmatpush1.msra.mxu0 0.0
        %2009 = vmatprep.subr.mxu0 0.0
        %2010 = vmatpush1.msra.mxu0 0.0
        %2011 = vmatprep.subr.mxu0 0.0
        %2012 = vmatpush1.msra.mxu0 0.0
        %2013 = vmatprep.subr.mxu0 0.0
        %2014 = vmatpush1.msra.mxu0 0.0
        %2015 = vmatprep.subr.mxu0 0.0
        %2016 = vmatpush1.msra.mxu0 0.0
        %2017 = vmatprep.subr.mxu0 0.0
        %2018 = vmatpush1.msra.mxu0 0.0
        %2019 = vmatprep.subr.mxu0 0.0
        %2020 = vmatpush1.msra.mxu0 0.0
        %2021 = vmatprep.subr.mxu0 0.0
        %2022 = vmatpush1.msra.mxu0 0.0
        %2023 = vmatprep.subr.mxu0 0.0
        %2024 = vmatpush1.msra.mxu0 0.0
        %2025 = vmatprep.subr.mxu0 0.0
        %2026 = vmatpush1.msra.mxu0 0.0
        %2027 = vmatprep.mubr.f32.mxu0 0.0
        %2028 = vmatmul.mubr.f32.gmra.mrb[0].mxu0 %v1961
        %v2029 = vpop.f32.mrb[0].mxu0
        %v2030 = vadd.f32 0.0, %v2029
        %v2031 = vpop.f32.mrb[0].mxu0
        %v2032 = vadd.f32 0.0, %v2031
        %2033 = vdwg.mxu0
        %2034 = vmatprep.subr.mxu0 %v1896
        %2035 = vmatpush1.msra.mxu0 %v1895
        %2036 = vmatprep.subr.mxu0 %v1898
        %2037 = vmatpush1.msra.mxu0 %v1897
        %2038 = vmatprep.subr.mxu0 %v1900
        %2039 = vmatpush1.msra.mxu0 %v1899
        %2040 = vmatprep.subr.mxu0 %v1902
        %2041 = vmatpush1.msra.mxu0 %v1901
        %2042 = vmatprep.subr.mxu0 %v1904
        %2043 = vmatpush1.msra.mxu0 %v1903
        %2044 = vmatprep.subr.mxu0 %v1906
        %2045 = vmatpush1.msra.mxu0 %v1905
        %2046 = vmatprep.subr.mxu0 %v1908
        %2047 = vmatpush1.msra.mxu0 %v1907
        %2048 = vmatprep.subr.mxu0 %v1910
        %2049 = vmatpush1.msra.mxu0 %v1909
        %2050 = vmatprep.subr.mxu0 %v1912
        %2051 = vmatpush1.msra.mxu0 %v1911
        %2052 = vmatprep.subr.mxu0 %v1914
        %2053 = vmatpush1.msra.mxu0 %v1913
        %2054 = vmatprep.subr.mxu0 %v1916
        %2055 = vmatpush1.msra.mxu0 %v1915
        %2056 = vmatprep.subr.mxu0 %v1918
        %2057 = vmatpush1.msra.mxu0 %v1917
        %2058 = vmatprep.subr.mxu0 %v1920
        %2059 = vmatpush1.msra.mxu0 %v1919
        %2060 = vmatprep.subr.mxu0 %v1922
        %2061 = vmatpush1.msra.mxu0 %v1921
        %2062 = vmatprep.subr.mxu0 %v1924
        %2063 = vmatpush1.msra.mxu0 %v1923
        %2064 = vmatprep.subr.mxu0 %v1926
        %2065 = vmatpush1.msra.mxu0 %v1925
        %2066 = vmatprep.subr.mxu0 0.0
        %2067 = vmatpush1.msra.mxu0 0.0
        %2068 = vmatprep.subr.mxu0 0.0
        %2069 = vmatpush1.msra.mxu0 0.0
        %2070 = vmatprep.subr.mxu0 0.0
        %2071 = vmatpush1.msra.mxu0 0.0
        %2072 = vmatprep.subr.mxu0 0.0
        %2073 = vmatpush1.msra.mxu0 0.0
        %2074 = vmatprep.subr.mxu0 0.0
        %2075 = vmatpush1.msra.mxu0 0.0
        %2076 = vmatprep.subr.mxu0 0.0
        %2077 = vmatpush1.msra.mxu0 0.0
        %2078 = vmatprep.subr.mxu0 0.0
        %2079 = vmatpush1.msra.mxu0 0.0
        %2080 = vmatprep.subr.mxu0 0.0
        %2081 = vmatpush1.msra.mxu0 0.0
        %2082 = vmatprep.subr.mxu0 0.0
        %2083 = vmatpush1.msra.mxu0 0.0
        %2084 = vmatprep.subr.mxu0 0.0
        %2085 = vmatpush1.msra.mxu0 0.0
        %2086 = vmatprep.subr.mxu0 0.0
        %2087 = vmatpush1.msra.mxu0 0.0
        %2088 = vmatprep.subr.mxu0 0.0
        %2089 = vmatpush1.msra.mxu0 0.0
        %2090 = vmatprep.subr.mxu0 0.0
        %2091 = vmatpush1.msra.mxu0 0.0
        %2092 = vmatprep.subr.mxu0 0.0
        %2093 = vmatpush1.msra.mxu0 0.0
        %2094 = vmatprep.subr.mxu0 0.0
        %2095 = vmatpush1.msra.mxu0 0.0
        %2096 = vmatprep.subr.mxu0 0.0
        %2097 = vmatpush1.msra.mxu0 0.0
        %2098 = vmatprep.mubr.f32.mxu0 0.0
        %2099 = vmatmul.mubr.f32.gmra.mrb[0].mxu0 %v1894
        %v2100 = vpop.f32.mrb[0].mxu0
        %v2101 = vadd.f32 %v2030, %v2100
        %v2102 = vpop.f32.mrb[0].mxu0
        %v2103 = vadd.f32 %v2032, %v2102
        %2104 = vdwg.mxu0
        %s2105 = scalar_lea.vmem %s14, 512
        %v2106 = vld [vmem:[%s2105] sm:$0xff]
        %v2107 = vld [vmem:[%s2105 + $0x8] sm:$0xff]
        %v2108 = vld [vmem:[%s2105 + $0x10] sm:$0xff]
        %v2109 = vld [vmem:[%s2105 + $0x18] sm:$0xff]
        %v2110 = vld [vmem:[%s2105 + $0x20] sm:$0xff]
        %v2111 = vld [vmem:[%s2105 + $0x28] sm:$0xff]
        %v2112 = vld [vmem:[%s2105 + $0x30] sm:$0xff]
        %v2113 = vld [vmem:[%s2105 + $0x38] sm:$0xff]
        %v2114 = vld [vmem:[%s2105 + $0x40] sm:$0xff]
        %v2115 = vld [vmem:[%s2105 + $0x48] sm:$0xff]
        %v2116 = vld [vmem:[%s2105 + $0x50] sm:$0xff]
        %v2117 = vld [vmem:[%s2105 + $0x58] sm:$0xff]
        %v2118 = vld [vmem:[%s2105 + $0x60] sm:$0xff]
        %v2119 = vld [vmem:[%s2105 + $0x68] sm:$0xff]
        %v2120 = vld [vmem:[%s2105 + $0x70] sm:$0xff]
        %v2121 = vld [vmem:[%s2105 + $0x78] sm:$0xff]
        %v2122 = vld [vmem:[%s2105 + $0x80] sm:$0xff]
        %v2123 = vld [vmem:[%s2105 + $0x88] sm:$0xff]
        %v2124 = vld [vmem:[%s2105 + $0x90] sm:$0xff]
        %v2125 = vld [vmem:[%s2105 + $0x98] sm:$0xff]
        %v2126 = vld [vmem:[%s2105 + $0xa0] sm:$0xff]
        %v2127 = vld [vmem:[%s2105 + $0xa8] sm:$0xff]
        %v2128 = vld [vmem:[%s2105 + $0xb0] sm:$0xff]
        %v2129 = vld [vmem:[%s2105 + $0xb8] sm:$0xff]
        %v2130 = vld [vmem:[%s2105 + $0xc0] sm:$0xff]
        %v2131 = vld [vmem:[%s2105 + $0xc8] sm:$0xff]
        %v2132 = vld [vmem:[%s2105 + $0xd0] sm:$0xff]
        %v2133 = vld [vmem:[%s2105 + $0xd8] sm:$0xff]
        %v2134 = vld [vmem:[%s2105 + $0xe0] sm:$0xff]
        %v2135 = vld [vmem:[%s2105 + $0xe8] sm:$0xff]
        %v2136 = vld [vmem:[%s2105 + $0xf0] sm:$0xff]
        %v2137 = vld [vmem:[%s2105 + $0xf8] sm:$0xff]
        %v2138 = vrot.slane %v1894, 2
        %2140 = vmatprep.subr.mxu0 %v2107
        %2141 = vmatpush1.msra.mxu0 %v2106
        %2142 = vmatprep.subr.mxu0 %v2109
        %2143 = vmatpush1.msra.mxu0 %v2108
        %2144 = vmatprep.subr.mxu0 %v2111
        %2145 = vmatpush1.msra.mxu0 %v2110
        %2146 = vmatprep.subr.mxu0 %v2113
        %2147 = vmatpush1.msra.mxu0 %v2112
        %2148 = vmatprep.subr.mxu0 %v2115
        %2149 = vmatpush1.msra.mxu0 %v2114
        %2150 = vmatprep.subr.mxu0 %v2117
        %2151 = vmatpush1.msra.mxu0 %v2116
        %2152 = vmatprep.subr.mxu0 %v2119
        %2153 = vmatpush1.msra.mxu0 %v2118
        %2154 = vmatprep.subr.mxu0 %v2121
        %2155 = vmatpush1.msra.mxu0 %v2120
        %2156 = vmatprep.subr.mxu0 %v2123
        %2157 = vmatpush1.msra.mxu0 %v2122
        %2158 = vmatprep.subr.mxu0 %v2125
        %2159 = vmatpush1.msra.mxu0 %v2124
        %2160 = vmatprep.subr.mxu0 %v2127
        %2161 = vmatpush1.msra.mxu0 %v2126
        %2162 = vmatprep.subr.mxu0 %v2129
        %2163 = vmatpush1.msra.mxu0 %v2128
        %2164 = vmatprep.subr.mxu0 %v2131
        %2165 = vmatpush1.msra.mxu0 %v2130
        %2166 = vmatprep.subr.mxu0 %v2133
        %2167 = vmatpush1.msra.mxu0 %v2132
        %2168 = vmatprep.subr.mxu0 %v2135
        %2169 = vmatpush1.msra.mxu0 %v2134
        %2170 = vmatprep.subr.mxu0 %v2137
        %2171 = vmatpush1.msra.mxu0 %v2136
        %2172 = vmatprep.subr.mxu0 0.0
        %2173 = vmatpush1.msra.mxu0 0.0
        %2174 = vmatprep.subr.mxu0 0.0
        %2175 = vmatpush1.msra.mxu0 0.0
        %2176 = vmatprep.subr.mxu0 0.0
        %2177 = vmatpush1.msra.mxu0 0.0
        %2178 = vmatprep.subr.mxu0 0.0
        %2179 = vmatpush1.msra.mxu0 0.0
        %2180 = vmatprep.subr.mxu0 0.0
        %2181 = vmatpush1.msra.mxu0 0.0
        %2182 = vmatprep.subr.mxu0 0.0
        %2183 = vmatpush1.msra.mxu0 0.0
        %2184 = vmatprep.subr.mxu0 0.0
        %2185 = vmatpush1.msra.mxu0 0.0
        %2186 = vmatprep.subr.mxu0 0.0
        %2187 = vmatpush1.msra.mxu0 0.0
        %2188 = vmatprep.subr.mxu0 0.0
        %2189 = vmatpush1.msra.mxu0 0.0
        %2190 = vmatprep.subr.mxu0 0.0
        %2191 = vmatpush1.msra.mxu0 0.0
        %2192 = vmatprep.subr.mxu0 0.0
        %2193 = vmatpush1.msra.mxu0 0.0
        %2194 = vmatprep.subr.mxu0 0.0
        %2195 = vmatpush1.msra.mxu0 0.0
        %2196 = vmatprep.subr.mxu0 0.0
        %2197 = vmatpush1.msra.mxu0 0.0
        %2198 = vmatprep.subr.mxu0 0.0
        %2199 = vmatpush1.msra.mxu0 0.0
        %2200 = vmatprep.subr.mxu0 0.0
        %2201 = vmatpush1.msra.mxu0 0.0
        %2202 = vmatprep.subr.mxu0 0.0
        %2203 = vmatpush1.msra.mxu0 0.0
        %2204 = vmatprep.mubr.f32.mxu0 0.0
        %2205 = vmatmul.mubr.f32.gmra.mrb[0].mxu0 %v2138
        %v2206 = vpop.f32.mrb[0].mxu0
        %v2207 = vadd.f32 0.0, %v2206
        %v2208 = vpop.f32.mrb[0].mxu0
        %v2209 = vadd.f32 0.0, %v2208
        %2210 = vdwg.mxu0
        %v2211 = vadd.f32 %v2101, %v2207
        %v2212 = vadd.f32 %v2103, %v2209
        %v2213 = vld [vmem:[%s15] sm:$0x3]
        %v2215 = vlaneseq
        %v2216 = vshrl.u32 %v2215, 7
        %v2217 = vsub.s32 0, %v2216
        %v2218 = vrot.slane %v2213, %v2217
        %v2219 = vlaneseq
        %v2220 = vshrl.u32 %v2219, 7
        %v2221 = vsub.s32 1, %v2220
        %v2222 = vrot.slane %v2213, %v2221
        %v2225 = vmul.f32 %v2211, %v2218
        %v2226 = vmul.f32 %v2212, %v2222
        %v2227 = vld [vmem:[%s16] sm:$0x3]
        %v2229 = vlaneseq
        %v2230 = vshrl.u32 %v2229, 7
        %v2231 = vsub.s32 0, %v2230
        %v2232 = vrot.slane %v2227, %v2231
        %v2233 = vlaneseq
        %v2234 = vshrl.u32 %v2233, 7
        %v2235 = vsub.s32 1, %v2234
        %v2236 = vrot.slane %v2227, %v2235
        %v2239 = vadd.f32 %v2225, %v2232
        %v2240 = vadd.f32 %v2226, %v2236
        %v2241 = vmax.f32 %v2239, 0.0
        %v2242 = vmax.f32 %v2240, 0.0
        %vm2243 = vcmask 1042432
        %v2244 = vsel %vm2243, %v2241, 0.0
        %v2245 = vrot.slane %v2244, 4
        %v2246 = vadd.f32 %v2244, %v2245
        %v2247 = vrot.slane %v2246, 2
        %v2248 = vadd.f32 %v2246, %v2247
        %v2249 = vrot.slane %v2248, 1
        %v2250 = vadd.f32 %v2248, %v2249
        %v2251 = vsel %vm2243, %v2242, 0.0
        %v2252 = vrot.slane %v2251, 4
        %v2253 = vadd.f32 %v2251, %v2252
        %v2254 = vrot.slane %v2253, 2
        %v2255 = vadd.f32 %v2253, %v2254
        %v2256 = vrot.slane %v2255, 1
        %v2257 = vadd.f32 %v2255, %v2256
        %v2258 = vrcp.pop 3.0
        %v2259 = vmul.f32 %v2250, %v2258
        %v2260 = vmul.f32 %v2257, %v2258
        %v2261 = vld [vmem:[%s17] sm:$0xff]
        %v2262 = vld [vmem:[%s17 + $0x8] sm:$0xff]
        %v2263 = vld [vmem:[%s17 + $0x10] sm:$0xff]
        %v2264 = vld [vmem:[%s17 + $0x18] sm:$0xff]
        %v2265 = vld [vmem:[%s17 + $0x20] sm:$0xff]
        %v2266 = vld [vmem:[%s17 + $0x28] sm:$0xff]
        %v2267 = vld [vmem:[%s17 + $0x30] sm:$0xff]
        %v2268 = vld [vmem:[%s17 + $0x38] sm:$0xff]
        %v2269 = vld [vmem:[%s17 + $0x40] sm:$0xff]
        %v2270 = vld [vmem:[%s17 + $0x48] sm:$0xff]
        %v2271 = vld [vmem:[%s17 + $0x50] sm:$0xff]
        %v2272 = vld [vmem:[%s17 + $0x58] sm:$0xff]
        %v2273 = vld [vmem:[%s17 + $0x60] sm:$0xff]
        %v2274 = vld [vmem:[%s17 + $0x68] sm:$0xff]
        %v2275 = vld [vmem:[%s17 + $0x70] sm:$0xff]
        %v2276 = vld [vmem:[%s17 + $0x78] sm:$0xff]
        %v2277 = vld [vmem:[%s17 + $0x80] sm:$0xff]
        %v2278 = vld [vmem:[%s17 + $0x88] sm:$0xff]
        %v2279 = vld [vmem:[%s17 + $0x90] sm:$0xff]
        %v2280 = vld [vmem:[%s17 + $0x98] sm:$0xff]
        %v2281 = vld [vmem:[%s17 + $0xa0] sm:$0xff]
        %v2282 = vld [vmem:[%s17 + $0xa8] sm:$0xff]
        %v2283 = vld [vmem:[%s17 + $0xb0] sm:$0xff]
        %v2284 = vld [vmem:[%s17 + $0xb8] sm:$0xff]
        %v2285 = vld [vmem:[%s17 + $0xc0] sm:$0xff]
        %v2286 = vld [vmem:[%s17 + $0xc8] sm:$0xff]
        %v2287 = vld [vmem:[%s17 + $0xd0] sm:$0xff]
        %v2288 = vld [vmem:[%s17 + $0xd8] sm:$0xff]
        %v2289 = vld [vmem:[%s17 + $0xe0] sm:$0xff]
        %v2290 = vld [vmem:[%s17 + $0xe8] sm:$0xff]
        %v2291 = vld [vmem:[%s17 + $0xf0] sm:$0xff]
        %v2292 = vld [vmem:[%s17 + $0xf8] sm:$0xff]
        %v2293 = vld [vmem:[%s18] sm:$0x1]
        %2294 = vmatprep.subr.mxu0 0.0
        %2295 = vmatpush1.msra.mxu0 %v2261
        %2296 = vmatprep.subr.mxu0 0.0
        %2297 = vmatpush1.msra.mxu0 %v2262
        %2298 = vmatprep.subr.mxu0 0.0
        %2299 = vmatpush1.msra.mxu0 %v2263
        %2300 = vmatprep.subr.mxu0 0.0
        %2301 = vmatpush1.msra.mxu0 %v2264
        %2302 = vmatprep.subr.mxu0 0.0
        %2303 = vmatpush1.msra.mxu0 %v2265
        %2304 = vmatprep.subr.mxu0 0.0
        %2305 = vmatpush1.msra.mxu0 %v2266
        %2306 = vmatprep.subr.mxu0 0.0
        %2307 = vmatpush1.msra.mxu0 %v2267
        %2308 = vmatprep.subr.mxu0 0.0
        %2309 = vmatpush1.msra.mxu0 %v2268
        %2310 = vmatprep.subr.mxu0 0.0
        %2311 = vmatpush1.msra.mxu0 %v2269
        %2312 = vmatprep.subr.mxu0 0.0
        %2313 = vmatpush1.msra.mxu0 %v2270
        %2314 = vmatprep.subr.mxu0 0.0
        %2315 = vmatpush1.msra.mxu0 %v2271
        %2316 = vmatprep.subr.mxu0 0.0
        %2317 = vmatpush1.msra.mxu0 %v2272
        %2318 = vmatprep.subr.mxu0 0.0
        %2319 = vmatpush1.msra.mxu0 %v2273
        %2320 = vmatprep.subr.mxu0 0.0
        %2321 = vmatpush1.msra.mxu0 %v2274
        %2322 = vmatprep.subr.mxu0 0.0
        %2323 = vmatpush1.msra.mxu0 %v2275
        %2324 = vmatprep.subr.mxu0 0.0
        %2325 = vmatpush1.msra.mxu0 %v2276
        %2326 = vmatprep.subr.mxu0 0.0
        %2327 = vmatpush1.msra.mxu0 %v2277
        %2328 = vmatprep.subr.mxu0 0.0
        %2329 = vmatpush1.msra.mxu0 %v2278
        %2330 = vmatprep.subr.mxu0 0.0
        %2331 = vmatpush1.msra.mxu0 %v2279
        %2332 = vmatprep.subr.mxu0 0.0
        %2333 = vmatpush1.msra.mxu0 %v2280
        %2334 = vmatprep.subr.mxu0 0.0
        %2335 = vmatpush1.msra.mxu0 %v2281
        %2336 = vmatprep.subr.mxu0 0.0
        %2337 = vmatpush1.msra.mxu0 %v2282
        %2338 = vmatprep.subr.mxu0 0.0
        %2339 = vmatpush1.msra.mxu0 %v2283
        %2340 = vmatprep.subr.mxu0 0.0
        %2341 = vmatpush1.msra.mxu0 %v2284
        %2342 = vmatprep.subr.mxu0 0.0
        %2343 = vmatpush1.msra.mxu0 %v2285
        %2344 = vmatprep.subr.mxu0 0.0
        %2345 = vmatpush1.msra.mxu0 %v2286
        %2346 = vmatprep.subr.mxu0 0.0
        %2347 = vmatpush1.msra.mxu0 %v2287
        %2348 = vmatprep.subr.mxu0 0.0
        %2349 = vmatpush1.msra.mxu0 %v2288
        %2350 = vmatprep.subr.mxu0 0.0
        %2351 = vmatpush1.msra.mxu0 %v2289
        %2352 = vmatprep.subr.mxu0 0.0
        %2353 = vmatpush1.msra.mxu0 %v2290
        %2354 = vmatprep.subr.mxu0 0.0
        %2355 = vmatpush1.msra.mxu0 %v2291
        %2356 = vmatprep.subr.mxu0 0.0
        %2357 = vmatpush1.msra.mxu0 %v2292
        %2358 = vmatprep.mubr.f32.mxu0 %v2260
        %2359 = vmatmul.mubr.f32.gmra.mrb[0].mxu0 %v2259
        %v2360 = vpop.f32.mrb[0].mxu0
        %v2361 = vadd.f32 %v2293, %v2360
        %v2362 = vpop.f32.mrb[0].mxu0
        %2363 = vdwg.mxu0
        %vm2364 = vcmask 491520
        %2365 = vst.msk [vmem:[%s595] sm:$0x1] %vm2364, %v2361
        %s2366 = sand.u32 %s445, 1
        %s2367 = scalar_lea.sflag [#allocation3], %s2366
        %s2368 = sand.u32 %s445, 1
        %s2369 = scalar_lea.vmem [#allocation2], %s2368
        // Predicated region
        $region97: #{basic_conv_forward.1} parent=95 // pred_check
          %p2370 = pneg %p455
        $region98: #{basic_conv_forward.1} parent=95 // pred_check_branch
          %2372 = sbr.rel (%p2370) target = $region100
        $region99: #{basic_conv_forward.1} parent=95 // pred_region
          %s2374 = ssub.s32 16, 16
          %2375 = vsyncadd %s2367, %s2374
          %s2376 = smul.addr %s33, 16
          %s2377 = scalar_lea.hbm %s19, %s2376
          %s2379 = sshll.u32 %s2369, 4
          %s2380 = int_to_ptr.vmem [resolvable:$true] %s2379
          %2382 = dma.vmem_to_hbm [thread:$0]  %s2380, 16, %s2377, %s2367
        $region100: #{basic_conv_forward.1} parent=95 // pred_fallthru
          _
      $region96: #{basic_conv_forward.1} parent=5 // pred_fallthru
        _
      %p2383 = scmp.le.s32.totalorder 2, %s28
      // Predicated region
      $region101: #{basic_conv_forward.1} parent=5 // pred_check
        %p2384 = pneg %p2383
      $region102: #{basic_conv_forward.1} parent=5 // pred_check_branch
        %2386 = sbr.rel (%p2384) target = $region104
      $region103: #{basic_conv_forward.1} parent=5 // pred_region
        %s2387 = ssub.s32 %s28, 2
        // Predicated region
        $region105: #{basic_conv_forward.1} parent=103 // pred_check
          %p2388 = pneg %p461
        $region106: #{basic_conv_forward.1} parent=103 // pred_check_branch
          %2390 = sbr.rel (%p2388) target = $region108
        $region107: #{basic_conv_forward.1} parent=103 // pred_region
          %s2391 = sand.u32 %s446, 1
          %s2392 = scalar_lea.sflag [#allocation3], %s2391
          %s2393 = sand.u32 %s446, 1
          %s2394 = scalar_lea.vmem [#allocation2], %s2393
          %2395 = dma.done %s2392, 16
        $region108: #{basic_conv_forward.1} parent=103 // pred_fallthru
          _
      $region104: #{basic_conv_forward.1} parent=5 // pred_fallthru
        _
    $region6: #{basic_conv_forward.1} parent=1 // loop_footer
      %s32 = sadd.s32 1, %s28
    $region7: #{basic_conv_forward.1} parent=1 // loop_footer_branch
      %27 = sbr.rel target = $region3
    $region8: #{basic_conv_forward.1} parent=1 // loop_exit
      _
    %2396 = vsyncpa [#allocation3], 1
    %s2397 = scalar_lea.sflag [#allocation3], 1
    %2398 = vsyncpa %s2397, 1

</llo_original>
